<compile_context>
chip_gen: v7x
topology: tpu7x:2x2x1
jax: 0.10.0
libtpu: 0.0.40
codegen_flags: <defaults>
</compile_context>

<pallas_src>
import jax
import jax.numpy as jnp
from jax.experimental import pallas as pl
from jax.experimental.pallas import tpu as pltpu


def _rup(x, m):
    return ((x + m - 1) // m) * m


# ----------------------------------------------------------------------------- kernel

def _upsample_ps_kernel(x_ref, m_ref, o_ref):
    """One (batch, H-tile) grid step.

    x_ref: (Cin, TH+2, W+2)       zero-padded input tile (no replication)
    m_ref: (3*Cin, W+2, Co*CG)    structural conv+shuffle matrix (f32), grid-invariant
    o_ref: (Co, TH, 4W)           output viewed as (B, Co, H, 4W); the two 2W halves of the
                                  lane dim are the two PixelShuffle row phases
    """
    cin = x_ref.shape[0]
    co = o_ref.shape[0]
    th = o_ref.shape[1]
    w4 = o_ref.shape[2]
    ncol = m_ref.shape[2]
    cgrp = ncol // co

    acc = jnp.zeros((th, ncol), jnp.float32)
    for ci in range(cin):
        for kh in range(3):
            slab = x_ref[ci, kh:kh + th, :].astype(jnp.float32)       # (TH, W+2)
            acc = acc + jnp.dot(slab, m_ref[ci * 3 + kh],
                                preferred_element_type=jnp.float32)

    # One dense store per output channel; channel groups in `acc` are 128-lane aligned.
    for c in range(co):
        o_ref[c] = acc[:, c * cgrp: c * cgrp + w4].astype(o_ref.dtype)


# ------------------------------------------------------------------------ host helpers

def _build_struct_weights(weight, W, cgrp):
    """(Cout, Cin, 3, 3) -> (3*Cin, W+2, Co*cgrp) structural matrix.

    M[ci*3+kh, j', c*cgrp + dh*2W + 2j + dw] = weight[4c+2dh+dw, ci, kh, j'-j]
    for j'-j in {0,1,2}, else 0.  Columns [4W, cgrp) of each channel group are zero
    padding so every channel group starts on a 128-lane boundary.
    """
    Cout, Cin, _, _ = weight.shape
    Co = Cout // 4
    jp = jnp.arange(W + 2)                               # j' (padded input column)
    j = jnp.arange(W)                                    # j  (conv output column)
    kw = jp[:, None] - j[None, :]                        # (W+2, W)
    valid = (kw >= 0) & (kw <= 2)
    kw_c = jnp.clip(kw, 0, 2)

    w6 = weight.astype(jnp.float32).reshape(Co, 2, 2, Cin, 3, 3)   # (c, dh, dw, ci, kh, kw)
    wt = jnp.transpose(w6, (3, 4, 0, 1, 2, 5))                     # (ci, kh, c, dh, dw, kw)
    g = jnp.where(valid, wt[..., kw_c], 0.0)                       # (ci, kh, c, dh, dw, j', j)
    g = jnp.transpose(g, (0, 1, 5, 2, 3, 6, 4))                    # (ci, kh, j', c, dh, j, dw)
    m = g.reshape(Cin, 3, W + 2, Co, 4 * W)                        # col-in-group = dh*2W+2j+dw
    if cgrp > 4 * W:
        m = jnp.pad(m, ((0, 0),) * 4 + ((0, cgrp - 4 * W),))
    return m.reshape(Cin * 3, W + 2, Co * cgrp)


def _build_input_tiles(x, tile_h):
    """(B, Cin, H, W) -> (B*nH, Cin, TH+2, W+2): zero-pad and halo-tile along H."""
    B, Cin, H, W = x.shape
    nH = H // tile_h
    xp = jnp.pad(x, ((0, 0), (0, 0), (1, 1), (1, 1)))
    if nH == 1:
        return xp
    tiles = [xp[:, :, i * tile_h: i * tile_h + tile_h + 2, :] for i in range(nH)]
    xt = jnp.stack(tiles, axis=1)                        # (B, nH, Cin, TH+2, W+2)
    return xt.reshape(B * nH, Cin, tile_h + 2, W + 2)


def _pick_tile_h(H, W, Cin, Co, B, budget_bytes=8 << 20, max_vregs=40):
    """Largest H-tile that respects vreg pressure and a per-generation-safe VMEM budget."""
    cgrp = _rup(4 * W, 128)
    ncol_tiles = (Co * cgrp) // 128
    cands = sorted({th for th in range(1, H + 1)
                    if H % th == 0 and (th == H or th % 8 == 0)}, reverse=True)

    def fits(th):
        # vregs: accumulator + current input slab + headroom (64 total on all generations)
        if -(-th // 8) * (ncol_tiles + 2) > max_vregs:
            return False
        # (8,128)-padded VMEM footprints, double-buffered.
        in_b = Cin * _rup(th + 2, 8) * _rup(W + 2, 128) * 4
        out_b = Co * _rup(th, 8) * _rup(4 * W, 128) * 4
        m_b = 3 * Cin * _rup(W + 2, 8) * _rup(Co * cgrp, 128) * 4
        return 2 * (in_b + out_b + m_b) <= budget_bytes

    feasible = [th for th in cands if fits(th)] or [cands[-1]]
    th = feasible[0]
    # v7x megacore: a single grid step leaves one TensorCore idle; prefer a 2-step split.
    if B * (H // th) == 1:
        for alt in feasible:
            if H // alt == 2:
                th = alt
                break
    return th


def pixel_shuffle_nchw(y, r=2):
    """torch.nn.PixelShuffle semantics on NCHW (used only by the reference check)."""
    B, C, H, W = y.shape
    Co = C // (r * r)
    y = y.reshape(B, Co, r, r, H, W)
    y = jnp.transpose(y, (0, 1, 4, 2, 5, 3))
    return y.reshape(B, Co, H * r, W * r)


# --------------------------------------------------------------------------- entry point

def upsample_forward(x, weight, *, tile_h=None):
    """Equivalent of Upsample(n_feat).forward on NCHW input.

    x:      (B, n_feat, H, W)
    weight: (2*n_feat, n_feat, 3, 3)   PyTorch Conv2d weight (OIHW), no bias
    returns (B, n_feat // 2, 2H, 2W)
    """
    B, Cin, H, W = x.shape
    Cout = weight.shape[0]
    assert weight.shape == (Cout, Cin, 3, 3)
    assert Cout == 2 * Cin, "Upsample uses Conv2d(n_feat, 2*n_feat, 3)"
    assert Cout % 4 == 0, "PixelShuffle(2) needs 2*n_feat divisible by 4"
    Co = Cout // 4

    cgrp = _rup(4 * W, 128)                  # 128-aligned output-column group per channel
    Ncol = Co * cgrp
    m_bytes = 3 * Cin * _rup(W + 2, 8) * _rup(Ncol, 128) * 4
    assert m_bytes <= (12 << 20), \
        "structural weight matrix too large; use an im2col MXU kernel at this size"

    if tile_h is None:
        tile_h = _pick_tile_h(H, W, Cin, Co, B)
    assert H % tile_h == 0 and (tile_h == H or tile_h % 8 == 0), tile_h
    nH = H // tile_h
    Wp = W + 2

    xt = _build_input_tiles(x, tile_h)               # (B*nH, Cin, TH+2, W+2)
    m = _build_struct_weights(weight, W, cgrp)       # (3*Cin, W+2, Ncol)

    in_b = Cin * _rup(tile_h + 2, 8) * _rup(Wp, 128) * 4
    out_b = Co * _rup(tile_h, 8) * _rup(4 * W, 128) * 4
    vmem_limit = int(min(max(2 * (in_b + out_b + m_bytes) + (4 << 20), 16 << 20), 32 << 20))

    out4 = pl.pallas_call(
        _upsample_ps_kernel,
        out_shape=jax.ShapeDtypeStruct((B, Co, H, 4 * W), x.dtype),
        grid_spec=pltpu.PrefetchScalarGridSpec(
            num_scalar_prefetch=0,
            grid=(B, nH),
            in_specs=[
                # haloed input tile for this (batch, H-tile)
                pl.BlockSpec((None, Cin, tile_h + 2, Wp),
                             lambda b, i: (b * nH + i, 0, 0, 0)),
                # structural weight matrix, resident across the whole grid
                pl.BlockSpec((3 * Cin, Wp, Ncol), lambda b, i: (0, 0, 0)),
            ],
            # dense output block of the free (B, Co, H, 4W) view
            out_specs=pl.BlockSpec((None, Co, tile_h, 4 * W),
                                   lambda b, i: (b, 0, i, 0)),
        ),
        compiler_params=pltpu.CompilerParams(
            dimension_semantics=("parallel", "parallel"),
            vmem_limit_bytes=vmem_limit,
        ),
    )(xt, m)

    # (B, Co, H, 4W) and (B, Co, 2H, 2W) have identical row-major layout: free view back.
    return out4.reshape(B, Co, 2 * H, 2 * W)


# ------------------------------------------------------------------------------- test

if __name__ == "__main__":
    key = jax.random.PRNGKey(0)

    def reference(x, w):
        y = jax.lax.conv_general_dilated(
            x, w, window_strides=(1, 1), padding="SAME",
            dimension_numbers=("NCHW", "OIHW", "NCHW"),
            precision=jax.lax.Precision.HIGHEST)
        return pixel_shuffle_nchw(y, 2)

    # Case 1: module-sized problem (B=2, n_feat=4, 16x16) -> single H-tile per batch.
    B, n_feat, H, W = 2, 4, 16, 16
    kx, kw = jax.random.split(key)
    x = jax.random.normal(kx, (B, n_feat, H, W), dtype=jnp.float32)
    wgt = jax.random.normal(kw, (2 * n_feat, n_feat, 3, 3), dtype=jnp.float32) * 0.1

    out = jax.block_until_ready(jax.jit(upsample_forward)(x, wgt))
    assert out.shape == (B, n_feat // 2, 2 * H, 2 * W), out.shape
    ref = reference(x, wgt)
    assert jnp.allclose(out, ref, atol=2e-4, rtol=2e-4)

    # Case 2: exercises the (batch, H-tile) grid (nH > 1) and a non-power-of-two n_feat.
    Bb, nfb, Hb, Wb = 1, 6, 24, 24
    kx2, kw2 = jax.random.split(kw)
    x2 = jax.random.normal(kx2, (Bb, nfb, Hb, Wb), dtype=jnp.float32)
    w2 = jax.random.normal(kw2, (2 * nfb, nfb, 3, 3), dtype=jnp.float32) * 0.1
    out2 = jax.block_until_ready(
        jax.jit(lambda a, b: upsample_forward(a, b, tile_h=8))(x2, w2))
    assert out2.shape == (Bb, nfb // 2, 2 * Hb, 2 * Wb), out2.shape
    ref2 = reference(x2, w2)
    assert jnp.allclose(out2, ref2, atol=2e-4, rtol=2e-4)

    print("KERNEL_OK")
</pallas_src>

<mosaic_0001>
module attributes {stable_mosaic.version = 11 : i64} {
  func.func @_upsample_ps_kernel(%arg0: i32, %arg1: i32, %arg2: memref<1x4x18x18xf32, #tpu.memory_space<vmem>>, %arg3: memref<12x18x256xf32, #tpu.memory_space<vmem>>, %arg4: memref<1x2x16x64xf32, #tpu.memory_space<vmem>>) attributes {dimension_semantics = [#tpu.dimension_semantics<parallel>, #tpu.dimension_semantics<parallel>], iteration_bounds = array<i64: 2, 1>, scalar_prefetch = 0 : i64, scratch_operands = 0 : i64, tpu.core_type = #tpu.core_type<tc>, window_params = [{transform_indices = @transform_0, window_bounds = array<i64: 1, 4, 18, 18>}, {pipeline_mode = #tpu.pipeline_mode<synchronous>, transform_indices = @transform_1, window_bounds = array<i64: 12, 18, 256>}, {transform_indices = @transform_2, window_bounds = array<i64: 1, 2, 16, 64>}]} {
    %cst = arith.constant 0.000000e+00 : f32
    %0 = vector.broadcast %cst : f32 to vector<16x256xf32>
    %c0 = arith.constant 0 : index
    %c0_0 = arith.constant 0 : index
    %c0_1 = arith.constant 0 : index
    %c0_2 = arith.constant 0 : index
    %1 = vector.load %arg2[%c0, %c0_0, %c0_1, %c0_2] : memref<1x4x18x18xf32, #tpu.memory_space<vmem>>, vector<1x1x16x18xf32>
    %2 = vector.shape_cast %1 : vector<1x1x16x18xf32> to vector<16x18xf32>
    %c0_3 = arith.constant 0 : index
    %c0_4 = arith.constant 0 : index
    %c0_5 = arith.constant 0 : index
    %3 = vector.load %arg3[%c0_3, %c0_4, %c0_5] : memref<12x18x256xf32, #tpu.memory_space<vmem>>, vector<1x18x256xf32>
    %4 = vector.shape_cast %3 : vector<1x18x256xf32> to vector<18x256xf32>
    %cst_6 = arith.constant dense<0.000000e+00> : vector<16x256xf32>
    %5 = tpu.matmul %2, %4, %cst_6 {dimension_numbers = #tpu.dot_dimension_numbers<[1], [0], [0], [1], [0, 0, 1, 1], [], []>} : vector<16x18xf32>, vector<18x256xf32>, vector<16x256xf32> -> vector<16x256xf32>
    %6 = arith.addf %0, %5 : vector<16x256xf32>
    %c0_7 = arith.constant 0 : index
    %c0_8 = arith.constant 0 : index
    %c1 = arith.constant 1 : index
    %c0_9 = arith.constant 0 : index
    %7 = vector.load %arg2[%c0_7, %c0_8, %c1, %c0_9] : memref<1x4x18x18xf32, #tpu.memory_space<vmem>>, vector<1x1x16x18xf32>
    %8 = vector.shape_cast %7 : vector<1x1x16x18xf32> to vector<16x18xf32>
    %c1_10 = arith.constant 1 : index
    %c0_11 = arith.constant 0 : index
    %c0_12 = arith.constant 0 : index
    %9 = vector.load %arg3[%c1_10, %c0_11, %c0_12] : memref<12x18x256xf32, #tpu.memory_space<vmem>>, vector<1x18x256xf32>
    %10 = vector.shape_cast %9 : vector<1x18x256xf32> to vector<18x256xf32>
    %cst_13 = arith.constant dense<0.000000e+00> : vector<16x256xf32>
    %11 = tpu.matmul %8, %10, %cst_13 {dimension_numbers = #tpu.dot_dimension_numbers<[1], [0], [0], [1], [0, 0, 1, 1], [], []>} : vector<16x18xf32>, vector<18x256xf32>, vector<16x256xf32> -> vector<16x256xf32>
    %12 = arith.addf %6, %11 : vector<16x256xf32>
    %c0_14 = arith.constant 0 : index
    %c0_15 = arith.constant 0 : index
    %c2 = arith.constant 2 : index
    %c0_16 = arith.constant 0 : index
    %13 = vector.load %arg2[%c0_14, %c0_15, %c2, %c0_16] : memref<1x4x18x18xf32, #tpu.memory_space<vmem>>, vector<1x1x16x18xf32>
    %14 = vector.shape_cast %13 : vector<1x1x16x18xf32> to vector<16x18xf32>
    %c2_17 = arith.constant 2 : index
    %c0_18 = arith.constant 0 : index
    %c0_19 = arith.constant 0 : index
    %15 = vector.load %arg3[%c2_17, %c0_18, %c0_19] : memref<12x18x256xf32, #tpu.memory_space<vmem>>, vector<1x18x256xf32>
    %16 = vector.shape_cast %15 : vector<1x18x256xf32> to vector<18x256xf32>
    %cst_20 = arith.constant dense<0.000000e+00> : vector<16x256xf32>
    %17 = tpu.matmul %14, %16, %cst_20 {dimension_numbers = #tpu.dot_dimension_numbers<[1], [0], [0], [1], [0, 0, 1, 1], [], []>} : vector<16x18xf32>, vector<18x256xf32>, vector<16x256xf32> -> vector<16x256xf32>
    %18 = arith.addf %12, %17 : vector<16x256xf32>
    %c0_21 = arith.constant 0 : index
    %c1_22 = arith.constant 1 : index
    %c0_23 = arith.constant 0 : index
    %c0_24 = arith.constant 0 : index
    %19 = vector.load %arg2[%c0_21, %c1_22, %c0_23, %c0_24] : memref<1x4x18x18xf32, #tpu.memory_space<vmem>>, vector<1x1x16x18xf32>
    %20 = vector.shape_cast %19 : vector<1x1x16x18xf32> to vector<16x18xf32>
    %c3 = arith.constant 3 : index
    %c0_25 = arith.constant 0 : index
    %c0_26 = arith.constant 0 : index
    %21 = vector.load %arg3[%c3, %c0_25, %c0_26] : memref<12x18x256xf32, #tpu.memory_space<vmem>>, vector<1x18x256xf32>
    %22 = vector.shape_cast %21 : vector<1x18x256xf32> to vector<18x256xf32>
    %cst_27 = arith.constant dense<0.000000e+00> : vector<16x256xf32>
    %23 = tpu.matmul %20, %22, %cst_27 {dimension_numbers = #tpu.dot_dimension_numbers<[1], [0], [0], [1], [0, 0, 1, 1], [], []>} : vector<16x18xf32>, vector<18x256xf32>, vector<16x256xf32> -> vector<16x256xf32>
    %24 = arith.addf %18, %23 : vector<16x256xf32>
    %c0_28 = arith.constant 0 : index
    %c1_29 = arith.constant 1 : index
    %c1_30 = arith.constant 1 : index
    %c0_31 = arith.constant 0 : index
    %25 = vector.load %arg2[%c0_28, %c1_29, %c1_30, %c0_31] : memref<1x4x18x18xf32, #tpu.memory_space<vmem>>, vector<1x1x16x18xf32>
    %26 = vector.shape_cast %25 : vector<1x1x16x18xf32> to vector<16x18xf32>
    %c4 = arith.constant 4 : index
    %c0_32 = arith.constant 0 : index
    %c0_33 = arith.constant 0 : index
    %27 = vector.load %arg3[%c4, %c0_32, %c0_33] : memref<12x18x256xf32, #tpu.memory_space<vmem>>, vector<1x18x256xf32>
    %28 = vector.shape_cast %27 : vector<1x18x256xf32> to vector<18x256xf32>
    %cst_34 = arith.constant dense<0.000000e+00> : vector<16x256xf32>
    %29 = tpu.matmul %26, %28, %cst_34 {dimension_numbers = #tpu.dot_dimension_numbers<[1], [0], [0], [1], [0, 0, 1, 1], [], []>} : vector<16x18xf32>, vector<18x256xf32>, vector<16x256xf32> -> vector<16x256xf32>
    %30 = arith.addf %24, %29 : vector<16x256xf32>
    %c0_35 = arith.constant 0 : index
    %c1_36 = arith.constant 1 : index
    %c2_37 = arith.constant 2 : index
    %c0_38 = arith.constant 0 : index
    %31 = vector.load %arg2[%c0_35, %c1_36, %c2_37, %c0_38] : memref<1x4x18x18xf32, #tpu.memory_space<vmem>>, vector<1x1x16x18xf32>
    %32 = vector.shape_cast %31 : vector<1x1x16x18xf32> to vector<16x18xf32>
    %c5 = arith.constant 5 : index
    %c0_39 = arith.constant 0 : index
    %c0_40 = arith.constant 0 : index
    %33 = vector.load %arg3[%c5, %c0_39, %c0_40] : memref<12x18x256xf32, #tpu.memory_space<vmem>>, vector<1x18x256xf32>
    %34 = vector.shape_cast %33 : vector<1x18x256xf32> to vector<18x256xf32>
    %cst_41 = arith.constant dense<0.000000e+00> : vector<16x256xf32>
    %35 = tpu.matmul %32, %34, %cst_41 {dimension_numbers = #tpu.dot_dimension_numbers<[1], [0], [0], [1], [0, 0, 1, 1], [], []>} : vector<16x18xf32>, vector<18x256xf32>, vector<16x256xf32> -> vector<16x256xf32>
    %36 = arith.addf %30, %35 : vector<16x256xf32>
    %c0_42 = arith.constant 0 : index
    %c2_43 = arith.constant 2 : index
    %c0_44 = arith.constant 0 : index
    %c0_45 = arith.constant 0 : index
    %37 = vector.load %arg2[%c0_42, %c2_43, %c0_44, %c0_45] : memref<1x4x18x18xf32, #tpu.memory_space<vmem>>, vector<1x1x16x18xf32>
    %38 = vector.shape_cast %37 : vector<1x1x16x18xf32> to vector<16x18xf32>
    %c6 = arith.constant 6 : index
    %c0_46 = arith.constant 0 : index
    %c0_47 = arith.constant 0 : index
    %39 = vector.load %arg3[%c6, %c0_46, %c0_47] : memref<12x18x256xf32, #tpu.memory_space<vmem>>, vector<1x18x256xf32>
    %40 = vector.shape_cast %39 : vector<1x18x256xf32> to vector<18x256xf32>
    %cst_48 = arith.constant dense<0.000000e+00> : vector<16x256xf32>
    %41 = tpu.matmul %38, %40, %cst_48 {dimension_numbers = #tpu.dot_dimension_numbers<[1], [0], [0], [1], [0, 0, 1, 1], [], []>} : vector<16x18xf32>, vector<18x256xf32>, vector<16x256xf32> -> vector<16x256xf32>
    %42 = arith.addf %36, %41 : vector<16x256xf32>
    %c0_49 = arith.constant 0 : index
    %c2_50 = arith.constant 2 : index
    %c1_51 = arith.constant 1 : index
    %c0_52 = arith.constant 0 : index
    %43 = vector.load %arg2[%c0_49, %c2_50, %c1_51, %c0_52] : memref<1x4x18x18xf32, #tpu.memory_space<vmem>>, vector<1x1x16x18xf32>
    %44 = vector.shape_cast %43 : vector<1x1x16x18xf32> to vector<16x18xf32>
    %c7 = arith.constant 7 : index
    %c0_53 = arith.constant 0 : index
    %c0_54 = arith.constant 0 : index
    %45 = vector.load %arg3[%c7, %c0_53, %c0_54] : memref<12x18x256xf32, #tpu.memory_space<vmem>>, vector<1x18x256xf32>
    %46 = vector.shape_cast %45 : vector<1x18x256xf32> to vector<18x256xf32>
    %cst_55 = arith.constant dense<0.000000e+00> : vector<16x256xf32>
    %47 = tpu.matmul %44, %46, %cst_55 {dimension_numbers = #tpu.dot_dimension_numbers<[1], [0], [0], [1], [0, 0, 1, 1], [], []>} : vector<16x18xf32>, vector<18x256xf32>, vector<16x256xf32> -> vector<16x256xf32>
    %48 = arith.addf %42, %47 : vector<16x256xf32>
    %c0_56 = arith.constant 0 : index
    %c2_57 = arith.constant 2 : index
    %c2_58 = arith.constant 2 : index
    %c0_59 = arith.constant 0 : index
    %49 = vector.load %arg2[%c0_56, %c2_57, %c2_58, %c0_59] : memref<1x4x18x18xf32, #tpu.memory_space<vmem>>, vector<1x1x16x18xf32>
    %50 = vector.shape_cast %49 : vector<1x1x16x18xf32> to vector<16x18xf32>
    %c8 = arith.constant 8 : index
    %c0_60 = arith.constant 0 : index
    %c0_61 = arith.constant 0 : index
    %51 = vector.load %arg3[%c8, %c0_60, %c0_61] : memref<12x18x256xf32, #tpu.memory_space<vmem>>, vector<1x18x256xf32>
    %52 = vector.shape_cast %51 : vector<1x18x256xf32> to vector<18x256xf32>
    %cst_62 = arith.constant dense<0.000000e+00> : vector<16x256xf32>
    %53 = tpu.matmul %50, %52, %cst_62 {dimension_numbers = #tpu.dot_dimension_numbers<[1], [0], [0], [1], [0, 0, 1, 1], [], []>} : vector<16x18xf32>, vector<18x256xf32>, vector<16x256xf32> -> vector<16x256xf32>
    %54 = arith.addf %48, %53 : vector<16x256xf32>
    %c0_63 = arith.constant 0 : index
    %c3_64 = arith.constant 3 : index
    %c0_65 = arith.constant 0 : index
    %c0_66 = arith.constant 0 : index
    %55 = vector.load %arg2[%c0_63, %c3_64, %c0_65, %c0_66] : memref<1x4x18x18xf32, #tpu.memory_space<vmem>>, vector<1x1x16x18xf32>
    %56 = vector.shape_cast %55 : vector<1x1x16x18xf32> to vector<16x18xf32>
    %c9 = arith.constant 9 : index
    %c0_67 = arith.constant 0 : index
    %c0_68 = arith.constant 0 : index
    %57 = vector.load %arg3[%c9, %c0_67, %c0_68] : memref<12x18x256xf32, #tpu.memory_space<vmem>>, vector<1x18x256xf32>
    %58 = vector.shape_cast %57 : vector<1x18x256xf32> to vector<18x256xf32>
    %cst_69 = arith.constant dense<0.000000e+00> : vector<16x256xf32>
    %59 = tpu.matmul %56, %58, %cst_69 {dimension_numbers = #tpu.dot_dimension_numbers<[1], [0], [0], [1], [0, 0, 1, 1], [], []>} : vector<16x18xf32>, vector<18x256xf32>, vector<16x256xf32> -> vector<16x256xf32>
    %60 = arith.addf %54, %59 : vector<16x256xf32>
    %c0_70 = arith.constant 0 : index
    %c3_71 = arith.constant 3 : index
    %c1_72 = arith.constant 1 : index
    %c0_73 = arith.constant 0 : index
    %61 = vector.load %arg2[%c0_70, %c3_71, %c1_72, %c0_73] : memref<1x4x18x18xf32, #tpu.memory_space<vmem>>, vector<1x1x16x18xf32>
    %62 = vector.shape_cast %61 : vector<1x1x16x18xf32> to vector<16x18xf32>
    %c10 = arith.constant 10 : index
    %c0_74 = arith.constant 0 : index
    %c0_75 = arith.constant 0 : index
    %63 = vector.load %arg3[%c10, %c0_74, %c0_75] : memref<12x18x256xf32, #tpu.memory_space<vmem>>, vector<1x18x256xf32>
    %64 = vector.shape_cast %63 : vector<1x18x256xf32> to vector<18x256xf32>
    %cst_76 = arith.constant dense<0.000000e+00> : vector<16x256xf32>
    %65 = tpu.matmul %62, %64, %cst_76 {dimension_numbers = #tpu.dot_dimension_numbers<[1], [0], [0], [1], [0, 0, 1, 1], [], []>} : vector<16x18xf32>, vector<18x256xf32>, vector<16x256xf32> -> vector<16x256xf32>
    %66 = arith.addf %60, %65 : vector<16x256xf32>
    %c0_77 = arith.constant 0 : index
    %c3_78 = arith.constant 3 : index
    %c2_79 = arith.constant 2 : index
    %c0_80 = arith.constant 0 : index
    %67 = vector.load %arg2[%c0_77, %c3_78, %c2_79, %c0_80] : memref<1x4x18x18xf32, #tpu.memory_space<vmem>>, vector<1x1x16x18xf32>
    %68 = vector.shape_cast %67 : vector<1x1x16x18xf32> to vector<16x18xf32>
    %c11 = arith.constant 11 : index
    %c0_81 = arith.constant 0 : index
    %c0_82 = arith.constant 0 : index
    %69 = vector.load %arg3[%c11, %c0_81, %c0_82] : memref<12x18x256xf32, #tpu.memory_space<vmem>>, vector<1x18x256xf32>
    %70 = vector.shape_cast %69 : vector<1x18x256xf32> to vector<18x256xf32>
    %cst_83 = arith.constant dense<0.000000e+00> : vector<16x256xf32>
    %71 = tpu.matmul %68, %70, %cst_83 {dimension_numbers = #tpu.dot_dimension_numbers<[1], [0], [0], [1], [0, 0, 1, 1], [], []>} : vector<16x18xf32>, vector<18x256xf32>, vector<16x256xf32> -> vector<16x256xf32>
    %72 = arith.addf %66, %71 : vector<16x256xf32>
    %73 = vector.extract_strided_slice %72 {offsets = [0, 0], sizes = [16, 64], strides = [1, 1]} : vector<16x256xf32> to vector<16x64xf32>
    %c0_84 = arith.constant 0 : index
    %c0_85 = arith.constant 0 : index
    %c0_86 = arith.constant 0 : index
    %c0_87 = arith.constant 0 : index
    %74 = vector.load %arg4[%c0_84, %c0_85, %c0_86, %c0_87] : memref<1x2x16x64xf32, #tpu.memory_space<vmem>>, vector<1x1x16x64xf32>
    %75 = vector.shape_cast %74 : vector<1x1x16x64xf32> to vector<16x64xf32>
    %76 = vector.shape_cast %73 : vector<16x64xf32> to vector<1x1x16x64xf32>
    tpu.vector_store %arg4[%c0_84, %c0_85, %c0_86, %c0_87], %76 {strides = array<i32>} : memref<1x2x16x64xf32, #tpu.memory_space<vmem>>, vector<1x1x16x64xf32>,
    %77 = vector.extract_strided_slice %72 {offsets = [0, 128], sizes = [16, 64], strides = [1, 1]} : vector<16x256xf32> to vector<16x64xf32>
    %c0_88 = arith.constant 0 : index
    %c1_89 = arith.constant 1 : index
    %c0_90 = arith.constant 0 : index
    %c0_91 = arith.constant 0 : index
    %78 = vector.load %arg4[%c0_88, %c1_89, %c0_90, %c0_91] : memref<1x2x16x64xf32, #tpu.memory_space<vmem>>, vector<1x1x16x64xf32>
    %79 = vector.shape_cast %78 : vector<1x1x16x64xf32> to vector<16x64xf32>
    %80 = vector.shape_cast %77 : vector<16x64xf32> to vector<1x1x16x64xf32>
    tpu.vector_store %arg4[%c0_88, %c1_89, %c0_90, %c0_91], %80 {strides = array<i32>} : memref<1x2x16x64xf32, #tpu.memory_space<vmem>>, vector<1x1x16x64xf32>,
    return
  }
  func.func @transform_0(%arg0: i32, %arg1: i32) -> (i32, i32, i32, i32) {
    %c1_i32 = arith.constant 1 : i32
    %0 = arith.muli %arg0, %c1_i32 : i32
    %1 = arith.addi %0, %arg1 : i32
    %c0_i32 = arith.constant 0 : i32
    %c0_i32_0 = arith.constant 0 : i32
    %c0_i32_1 = arith.constant 0 : i32
    %c0_i32_2 = arith.constant 0 : i32
    return %1, %c0_i32, %c0_i32_0, %c0_i32_1 : i32, i32, i32, i32
  }
  func.func @transform_1(%arg0: i32, %arg1: i32) -> (i32, i32, i32) {
    %c0_i32 = arith.constant 0 : i32
    %c0_i32_0 = arith.constant 0 : i32
    %c0_i32_1 = arith.constant 0 : i32
    %c0_i32_2 = arith.constant 0 : i32
    return %c0_i32, %c0_i32_0, %c0_i32_1 : i32, i32, i32
  }
  func.func @transform_2(%arg0: i32, %arg1: i32) -> (i32, i32, i32, i32) {
    %c0_i32 = arith.constant 0 : i32
    %c0_i32_0 = arith.constant 0 : i32
    %c0_i32_1 = arith.constant 0 : i32
    return %arg0, %c0_i32, %arg1, %c0_i32_0 : i32, i32, i32, i32
  }
}

</mosaic_0001>

<llo_original>
// kernel: upsample_forward.1
$region0: #{upsample_forward.1}
  #allocation0 [shape = 'u32[]', space=smem, size = 0x4, offset = 0x4, fixed_abs, tag = 'smem constant byte address 0x4 - core index']
  #allocation1 [shape = 'u32[144,128]{1,0:T(1,128)}', space=vmem, size = 0x12000, scoped, tag = 'internal scratch']
  %s0 = inlined_call_operand.vmem [shape: f32[2,4,18,18], index: 0, kind: input, shape index: {}]
  %s1 = inlined_call_operand.vmem [shape: f32[12,18,256], index: 1, kind: input, shape index: {}]
  %s2 = inlined_call_operand.vmem [shape: f32[2,2,16,64], index: 2, kind: output, shape index: {}]
  %s3 = sld [smem:[#allocation0]]
  $region41: #{upsample_forward.1} parent=0
    _
  %s5 = ssub.s32 1, %s3
  %s6 = scalar_select 0, %s5, %s3
  loop: start=0, step=1, limit=4
  $region2: #{upsample_forward.1} parent=0 // loop_pre_header
    _
  $region3: #{upsample_forward.1} parent=0 // loop_header
    %s8 = sphi 0, %s12
    %p9 = scmp.ge.s32.totalorder %s8, 4
    %s15 = sphi 0, %s27
    %s16 = sphi 0, %s23
    %s17 = sphi 0, %s15
    %s18 = sphi 0, %s16
    %s19 = sphi 0, %s17
    %s20 = sphi 0, %s18
    %s32 = sphi 0, %s34
    %s35 = sphi 0, %s32
    %s36 = sphi 0, %s35
    %s52 = sphi 0, %s36
    %s56 = sphi 0, %s56
    %s58 = sphi 0, %s56
    %s59 = sphi 0, %s58
    %s73 = sphi 0, %s59
    %s81 = sphi 0, %s83
    %s84 = sphi 0, %s81
    %s85 = sphi 0, %s84
    %s101 = sphi 0, %s85
  $region4: #{upsample_forward.1} parent=0 // loop_header_branch
    %11 = sbr.rel (%p9) target = $region8
  $region5: #{upsample_forward.1} parent=0 // loop_body
    %s13 = ssub.s32 %s8, 1
    %s14 = ssub.s32 %s8, 2
    %s21 = sadd.s32 1, %s16
    %p22 = scmp.ge.s32.totalorder %s21, 1
    %s23 = scalar_select %p22, 0, %s21
    %s24 = sadd.s32 1, %s15
    %s25 = scalar_select %p22, %s24, %s15
    %p26 = scmp.ge.s32.totalorder %s25, 2
    %s27 = scalar_select %p26, 0, %s25
    %s28 = sadd.s32 %s15, %s16
    %s29 = sadd.s32 %s27, %s23
    %s30 = ssub.s32 %s28, %s29
    %p31 = scmp.eq.s32.totalorder %s30, 0
    %s33 = sadd.s32 %s32, 1
    %s34 = scalar_select %p31, %s32, %s33
    %p37 = pneg %p31
    %p38 = scmp.eq.s32.totalorder %s8, 1
    %p39 = por %p37, %p38
    %p40 = scmp.ne.s32.totalorder %s32, %s35
    %p41 = scmp.eq.s32.totalorder %s8, 0
    %p42 = por %p40, %p41
    %p43 = scmp.ne.s32.totalorder %s32, %s35
    %p44 = scmp.eq.s32.totalorder %s13, 1
    %p45 = por %p43, %p44
    %p46 = scmp.ne.s32.totalorder %s35, %s36
    %p47 = scmp.eq.s32.totalorder %s13, 0
    %p48 = por %p46, %p47
    %p49 = scmp.ne.s32.totalorder %s35, %s36
    %p50 = scmp.eq.s32.totalorder %s14, 1
    %p51 = por %p49, %p50
    %p53 = scmp.ne.s32.totalorder %s36, %s52
    %p54 = scmp.eq.s32.totalorder %s14, 0
    %p55 = por %p53, %p54
    %s57 = sadd.s32 %s56, 1
    %p60 = scmp.eq.s32.totalorder %s8, 1
    %p61 = scmp.ne.s32.totalorder %s56, %s58
    %p62 = scmp.eq.s32.totalorder %s8, 0
    %p63 = por %p61, %p62
    %p64 = scmp.ne.s32.totalorder %s56, %s58
    %p65 = scmp.eq.s32.totalorder %s13, 1
    %p66 = por %p64, %p65
    %p67 = scmp.ne.s32.totalorder %s58, %s59
    %p68 = scmp.eq.s32.totalorder %s13, 0
    %p69 = por %p67, %p68
    %p70 = scmp.ne.s32.totalorder %s58, %s59
    %p71 = scmp.eq.s32.totalorder %s14, 1
    %p72 = por %p70, %p71
    %p74 = scmp.ne.s32.totalorder %s59, %s73
    %p75 = scmp.eq.s32.totalorder %s14, 0
    %p76 = por %p74, %p75
    %s77 = ssub.s32 %s15, %s27
    %s78 = ssub.s32 %s16, %s23
    %s79 = sor.u32 %s77, %s78
    %p80 = scmp.eq.s32.totalorder %s79, 0
    %s82 = sadd.s32 %s81, 1
    %s83 = scalar_select %p80, %s81, %s82
    %p86 = pneg %p80
    %p87 = scmp.eq.s32.totalorder %s8, 1
    %p88 = por %p86, %p87
    %p89 = scmp.ne.s32.totalorder %s81, %s84
    %p90 = scmp.eq.s32.totalorder %s8, 0
    %p91 = por %p89, %p90
    %p92 = scmp.ne.s32.totalorder %s81, %s84
    %p93 = scmp.eq.s32.totalorder %s13, 1
    %p94 = por %p92, %p93
    %p95 = scmp.ne.s32.totalorder %s84, %s85
    %p96 = scmp.eq.s32.totalorder %s13, 0
    %p97 = por %p95, %p96
    %p98 = scmp.ne.s32.totalorder %s84, %s85
    %p99 = scmp.eq.s32.totalorder %s14, 1
    %p100 = por %p98, %p99
    %p102 = scmp.ne.s32.totalorder %s85, %s101
    %p103 = scmp.eq.s32.totalorder %s14, 0
    %p104 = por %p102, %p103
    %p105 = scmp.le.s32.totalorder 1, %s8
    %p106 = scmp.lt.s32.totalorder %s8, 3
    %p107 = pnand %p105, %p106
    %p108 = pneg %p107
    // Predicated region
    $region9: #{upsample_forward.1} parent=5 // pred_check
      _
    $region10: #{upsample_forward.1} parent=5 // pred_check_branch
      %110 = sbr.rel (%p107) target = $region12
    $region11: #{upsample_forward.1} parent=5 // pred_region
      %s111 = ssub.s32 %s8, 1
      // Predicated region
      $region13: #{upsample_forward.1} parent=11 // pred_check
        %p112 = pneg %p69
      $region14: #{upsample_forward.1} parent=11 // pred_check_branch
        %114 = sbr.rel (%p112) target = $region16
      $region15: #{upsample_forward.1} parent=11 // pred_region
        _
      $region16: #{upsample_forward.1} parent=11 // pred_fallthru
        _
    $region12: #{upsample_forward.1} parent=5 // pred_fallthru
      _
    %p115 = scmp.lt.s32.totalorder %s8, 2
    // Predicated region
    $region17: #{upsample_forward.1} parent=5 // pred_check
      %p116 = pneg %p115
    $region18: #{upsample_forward.1} parent=5 // pred_check_branch
      %118 = sbr.rel (%p116) target = $region20
    $region19: #{upsample_forward.1} parent=5 // pred_region
      // Predicated region
      $region21: #{upsample_forward.1} parent=19 // pred_check
        %p119 = pneg %p42
      $region22: #{upsample_forward.1} parent=19 // pred_check_branch
        %121 = sbr.rel (%p119) target = $region24
      $region23: #{upsample_forward.1} parent=19 // pred_region
        %s122 = sadd.s32 %s15, %s16
        %p123 = scmp.lt.s32.totalorder %s122, 1
        %s124 = scalar_select %p123, %s122, 1
        %s125 = smul.addr %s124, 12
        %s126 = smul.addr %s125, 8
        %s127 = scalar_lea.vmem %s0, %s126
        %s128 = sadd.s32 %s15, %s16
      $region24: #{upsample_forward.1} parent=19 // pred_fallthru
        _
    $region20: #{upsample_forward.1} parent=5 // pred_fallthru
      _
    %p129 = scmp.le.s32.totalorder 1, %s8
    %p130 = scmp.lt.s32.totalorder %s8, 3
    %p131 = pnand %p129, %p130
    %p132 = pneg %p131
    // Predicated region
    $region25: #{upsample_forward.1} parent=5 // pred_check
      _
    $region26: #{upsample_forward.1} parent=5 // pred_check_branch
      %134 = sbr.rel (%p131) target = $region28
    $region27: #{upsample_forward.1} parent=5 // pred_region
      %s135 = ssub.s32 %s8, 1
      %s136 = sadd.s32 %s17, %s18
      %p137 = scmp.lt.s32.totalorder %s136, 1
      %s138 = scalar_select %p137, %s136, 1
      %s139 = smul.addr %s138, 12
      %s140 = smul.addr %s139, 8
      %s141 = scalar_lea.vmem %s0, %s140
      %p142 = pneg %p48
      %p143 = pneg %p45
      %p144 = pneg %p69
      %p145 = pneg %p66
      %p146 = pneg %p97
      %p147 = pneg %p94
      %s148 = smul.u32 2, %s18
      %p149 = scmp.lt.s32.totalorder %s17, 1
      %s150 = scalar_select %p149, %s17, 1
      %p151 = scmp.lt.s32.totalorder %s148, 1
      %s152 = scalar_select %p151, %s148, 1
      %s153 = smul.addr %s150, 4
      %s154 = sadd.s32 %s152, %s153
      %s155 = smul.addr %s154, 8
      %s156 = scalar_lea.vmem %s2, %s155
      %s157 = sadd.s32 %s17, %s18
      %p158 = scmp.lt.s32.totalorder %s157, 1
      %s159 = scalar_select %p158, %s157, 1
      %s160 = smul.addr %s159, 12
      %s161 = smul.addr %s160, 8
      %s162 = scalar_lea.vmem %s0, %s161
      %s163 = sadd.s32 %s17, %s18
      %s164 = smul.u32 2, %s18
      %p165 = scmp.lt.s32.totalorder %s17, 1
      %s166 = scalar_select %p165, %s17, 1
      %p167 = scmp.lt.s32.totalorder %s164, 1
      %s168 = scalar_select %p167, %s164, 1
      %s169 = smul.addr %s166, 4
      %s170 = sadd.s32 %s168, %s169
      %s171 = smul.addr %s170, 8
      %s172 = scalar_lea.vmem %s2, %s171
      %s173 = smul.u32 2, %s18
      %v174 = vld [vmem:[%s162] sm:$0xff]
      %v175 = vld [vmem:[%s162 + $0x8] sm:$0xff]
      %v176 = vld [vmem:[%s1] sm:$0xff]
      %v177 = vld [vmem:[%s1 + $0x8] sm:$0xff]
      %v178 = vld [vmem:[%s1 + $0x10] sm:$0xff]
      %v179 = vld [vmem:[%s1 + $0x18] sm:$0xff]
      %v180 = vld [vmem:[%s1 + $0x20] sm:$0x3]
      %v181 = vld [vmem:[%s1 + $0x28] sm:$0x3]
      %v182 = vld [vmem:[%s162 + $0x1] sm:$0xff]
      %v183 = vld [vmem:[%s162 + $0x9] sm:$0xff]
      %s184 = scalar_lea.vmem %s1, 48
      %v185 = vld [vmem:[%s184] sm:$0xff]
      %v186 = vld [vmem:[%s184 + $0x8] sm:$0xff]
      %v187 = vld [vmem:[%s184 + $0x10] sm:$0xff]
      %v188 = vld [vmem:[%s184 + $0x18] sm:$0xff]
      %v189 = vld [vmem:[%s184 + $0x20] sm:$0x3]
      %v190 = vld [vmem:[%s184 + $0x28] sm:$0x3]
      %vm191 = vcmask 146432
      %v193 = vsel %vm191, %v182, 0
      %v196 = vsel %vm191, %v183, 0
      %vm198 = vcmask 1041408
      %v200 = vsel %vm198, %v189, 0
      %v203 = vsel %vm198, %v190, 0
      %205 = vmatprep.subr.mxu0 %v186
      %206 = vmatpush1.msra.mxu0 %v185
      %207 = vmatprep.subr.mxu0 %v188
      %208 = vmatpush1.msra.mxu0 %v187
      %209 = vmatprep.subr.mxu0 %v203
      %210 = vmatpush1.msra.mxu0 %v200
      %211 = vmatprep.subr.mxu0 0.0
      %212 = vmatpush1.msra.mxu0 0.0
      %213 = vmatprep.subr.mxu0 0.0
      %214 = vmatpush1.msra.mxu0 0.0
      %215 = vmatprep.subr.mxu0 0.0
      %216 = vmatpush1.msra.mxu0 0.0
      %217 = vmatprep.subr.mxu0 0.0
      %218 = vmatpush1.msra.mxu0 0.0
      %219 = vmatprep.subr.mxu0 0.0
      %220 = vmatpush1.msra.mxu0 0.0
      %221 = vmatprep.subr.mxu0 0.0
      %222 = vmatpush1.msra.mxu0 0.0
      %223 = vmatprep.subr.mxu0 0.0
      %224 = vmatpush1.msra.mxu0 0.0
      %225 = vmatprep.subr.mxu0 0.0
      %226 = vmatpush1.msra.mxu0 0.0
      %227 = vmatprep.subr.mxu0 0.0
      %228 = vmatpush1.msra.mxu0 0.0
      %229 = vmatprep.subr.mxu0 0.0
      %230 = vmatpush1.msra.mxu0 0.0
      %231 = vmatprep.subr.mxu0 0.0
      %232 = vmatpush1.msra.mxu0 0.0
      %233 = vmatprep.subr.mxu0 0.0
      %234 = vmatpush1.msra.mxu0 0.0
      %235 = vmatprep.subr.mxu0 0.0
      %236 = vmatpush1.msra.mxu0 0.0
      %237 = vmatprep.subr.mxu0 0.0
      %238 = vmatpush1.msra.mxu0 0.0
      %239 = vmatprep.subr.mxu0 0.0
      %240 = vmatpush1.msra.mxu0 0.0
      %241 = vmatprep.subr.mxu0 0.0
      %242 = vmatpush1.msra.mxu0 0.0
      %243 = vmatprep.subr.mxu0 0.0
      %244 = vmatpush1.msra.mxu0 0.0
      %245 = vmatprep.subr.mxu0 0.0
      %246 = vmatpush1.msra.mxu0 0.0
      %247 = vmatprep.subr.mxu0 0.0
      %248 = vmatpush1.msra.mxu0 0.0
      %249 = vmatprep.subr.mxu0 0.0
      %250 = vmatpush1.msra.mxu0 0.0
      %251 = vmatprep.subr.mxu0 0.0
      %252 = vmatpush1.msra.mxu0 0.0
      %253 = vmatprep.subr.mxu0 0.0
      %254 = vmatpush1.msra.mxu0 0.0
      %255 = vmatprep.subr.mxu0 0.0
      %256 = vmatpush1.msra.mxu0 0.0
      %257 = vmatprep.subr.mxu0 0.0
      %258 = vmatpush1.msra.mxu0 0.0
      %259 = vmatprep.subr.mxu0 0.0
      %260 = vmatpush1.msra.mxu0 0.0
      %261 = vmatprep.subr.mxu0 0.0
      %262 = vmatpush1.msra.mxu0 0.0
      %263 = vmatprep.subr.mxu0 0.0
      %264 = vmatpush1.msra.mxu0 0.0
      %265 = vmatprep.subr.mxu0 0.0
      %266 = vmatpush1.msra.mxu0 0.0
      %267 = vmatprep.subr.mxu0 0.0
      %268 = vmatpush1.msra.mxu0 0.0
      %269 = vmatprep.mubr.f32.mxu0 0.0
      %270 = vmatmul.mubr.f32.gmra.mrb[0].mxu0 %v193
      %v271 = vpop.f32.mrb[0].mxu0
      %v272 = vadd.f32 0.0, %v271
      %v273 = vpop.f32.mrb[0].mxu0
      %v274 = vadd.f32 0.0, %v273
      %275 = vmatprep.mubr.f32.mxu0 0.0
      %276 = vmatmul.mubr.f32.gmra.mrb[0].mxu0 %v196
      %v277 = vpop.f32.mrb[0].mxu0
      %v278 = vadd.f32 0.0, %v277
      %v279 = vpop.f32.mrb[0].mxu0
      %v280 = vadd.f32 0.0, %v279
      %281 = vdwg.mxu0
      %v283 = vsel %vm191, %v174, 0
      %v286 = vsel %vm191, %v175, 0
      %v289 = vsel %vm198, %v180, 0
      %v292 = vsel %vm198, %v181, 0
      %294 = vmatprep.subr.mxu0 %v177
      %295 = vmatpush1.msra.mxu0 %v176
      %296 = vmatprep.subr.mxu0 %v179
      %297 = vmatpush1.msra.mxu0 %v178
      %298 = vmatprep.subr.mxu0 %v292
      %299 = vmatpush1.msra.mxu0 %v289
      %300 = vmatprep.subr.mxu0 0.0
      %301 = vmatpush1.msra.mxu0 0.0
      %302 = vmatprep.subr.mxu0 0.0
      %303 = vmatpush1.msra.mxu0 0.0
      %304 = vmatprep.subr.mxu0 0.0
      %305 = vmatpush1.msra.mxu0 0.0
      %306 = vmatprep.subr.mxu0 0.0
      %307 = vmatpush1.msra.mxu0 0.0
      %308 = vmatprep.subr.mxu0 0.0
      %309 = vmatpush1.msra.mxu0 0.0
      %310 = vmatprep.subr.mxu0 0.0
      %311 = vmatpush1.msra.mxu0 0.0
      %312 = vmatprep.subr.mxu0 0.0
      %313 = vmatpush1.msra.mxu0 0.0
      %314 = vmatprep.subr.mxu0 0.0
      %315 = vmatpush1.msra.mxu0 0.0
      %316 = vmatprep.subr.mxu0 0.0
      %317 = vmatpush1.msra.mxu0 0.0
      %318 = vmatprep.subr.mxu0 0.0
      %319 = vmatpush1.msra.mxu0 0.0
      %320 = vmatprep.subr.mxu0 0.0
      %321 = vmatpush1.msra.mxu0 0.0
      %322 = vmatprep.subr.mxu0 0.0
      %323 = vmatpush1.msra.mxu0 0.0
      %324 = vmatprep.subr.mxu0 0.0
      %325 = vmatpush1.msra.mxu0 0.0
      %326 = vmatprep.subr.mxu0 0.0
      %327 = vmatpush1.msra.mxu0 0.0
      %328 = vmatprep.subr.mxu0 0.0
      %329 = vmatpush1.msra.mxu0 0.0
      %330 = vmatprep.subr.mxu0 0.0
      %331 = vmatpush1.msra.mxu0 0.0
      %332 = vmatprep.subr.mxu0 0.0
      %333 = vmatpush1.msra.mxu0 0.0
      %334 = vmatprep.subr.mxu0 0.0
      %335 = vmatpush1.msra.mxu0 0.0
      %336 = vmatprep.subr.mxu0 0.0
      %337 = vmatpush1.msra.mxu0 0.0
      %338 = vmatprep.subr.mxu0 0.0
      %339 = vmatpush1.msra.mxu0 0.0
      %340 = vmatprep.subr.mxu0 0.0
      %341 = vmatpush1.msra.mxu0 0.0
      %342 = vmatprep.subr.mxu0 0.0
      %343 = vmatpush1.msra.mxu0 0.0
      %344 = vmatprep.subr.mxu0 0.0
      %345 = vmatpush1.msra.mxu0 0.0
      %346 = vmatprep.subr.mxu0 0.0
      %347 = vmatpush1.msra.mxu0 0.0
      %348 = vmatprep.subr.mxu0 0.0
      %349 = vmatpush1.msra.mxu0 0.0
      %350 = vmatprep.subr.mxu0 0.0
      %351 = vmatpush1.msra.mxu0 0.0
      %352 = vmatprep.subr.mxu0 0.0
      %353 = vmatpush1.msra.mxu0 0.0
      %354 = vmatprep.subr.mxu0 0.0
      %355 = vmatpush1.msra.mxu0 0.0
      %356 = vmatprep.subr.mxu0 0.0
      %357 = vmatpush1.msra.mxu0 0.0
      %358 = vmatprep.mubr.f32.mxu0 0.0
      %359 = vmatmul.mubr.f32.gmra.mrb[0].mxu0 %v283
      %v360 = vpop.f32.mrb[0].mxu0
      %v361 = vadd.f32 %v272, %v360
      %v362 = vpop.f32.mrb[0].mxu0
      %v363 = vadd.f32 %v274, %v362
      %364 = vmatprep.mubr.f32.mxu0 0.0
      %365 = vmatmul.mubr.f32.gmra.mrb[0].mxu0 %v286
      %v366 = vpop.f32.mrb[0].mxu0
      %v367 = vadd.f32 %v278, %v366
      %v368 = vpop.f32.mrb[0].mxu0
      %v369 = vadd.f32 %v280, %v368
      %370 = vdwg.mxu0
      %v371 = vld [vmem:[%s162 + $0x2] sm:$0xff]
      %v372 = vld [vmem:[%s162 + $0xa] sm:$0xff]
      %s373 = scalar_lea.vmem %s1, 96
      %v374 = vld [vmem:[%s373] sm:$0xff]
      %v375 = vld [vmem:[%s373 + $0x8] sm:$0xff]
      %v376 = vld [vmem:[%s373 + $0x10] sm:$0xff]
      %v377 = vld [vmem:[%s373 + $0x18] sm:$0xff]
      %v378 = vld [vmem:[%s373 + $0x20] sm:$0x3]
      %v379 = vld [vmem:[%s373 + $0x28] sm:$0x3]
      %v381 = vsel %vm191, %v371, 0
      %v384 = vsel %vm191, %v372, 0
      %v387 = vsel %vm198, %v378, 0
      %v390 = vsel %vm198, %v379, 0
      %392 = vmatprep.subr.mxu0 %v375
      %393 = vmatpush1.msra.mxu0 %v374
      %394 = vmatprep.subr.mxu0 %v377
      %395 = vmatpush1.msra.mxu0 %v376
      %396 = vmatprep.subr.mxu0 %v390
      %397 = vmatpush1.msra.mxu0 %v387
      %398 = vmatprep.subr.mxu0 0.0
      %399 = vmatpush1.msra.mxu0 0.0
      %400 = vmatprep.subr.mxu0 0.0
      %401 = vmatpush1.msra.mxu0 0.0
      %402 = vmatprep.subr.mxu0 0.0
      %403 = vmatpush1.msra.mxu0 0.0
      %404 = vmatprep.subr.mxu0 0.0
      %405 = vmatpush1.msra.mxu0 0.0
      %406 = vmatprep.subr.mxu0 0.0
      %407 = vmatpush1.msra.mxu0 0.0
      %408 = vmatprep.subr.mxu0 0.0
      %409 = vmatpush1.msra.mxu0 0.0
      %410 = vmatprep.subr.mxu0 0.0
      %411 = vmatpush1.msra.mxu0 0.0
      %412 = vmatprep.subr.mxu0 0.0
      %413 = vmatpush1.msra.mxu0 0.0
      %414 = vmatprep.subr.mxu0 0.0
      %415 = vmatpush1.msra.mxu0 0.0
      %416 = vmatprep.subr.mxu0 0.0
      %417 = vmatpush1.msra.mxu0 0.0
      %418 = vmatprep.subr.mxu0 0.0
      %419 = vmatpush1.msra.mxu0 0.0
      %420 = vmatprep.subr.mxu0 0.0
      %421 = vmatpush1.msra.mxu0 0.0
      %422 = vmatprep.subr.mxu0 0.0
      %423 = vmatpush1.msra.mxu0 0.0
      %424 = vmatprep.subr.mxu0 0.0
      %425 = vmatpush1.msra.mxu0 0.0
      %426 = vmatprep.subr.mxu0 0.0
      %427 = vmatpush1.msra.mxu0 0.0
      %428 = vmatprep.subr.mxu0 0.0
      %429 = vmatpush1.msra.mxu0 0.0
      %430 = vmatprep.subr.mxu0 0.0
      %431 = vmatpush1.msra.mxu0 0.0
      %432 = vmatprep.subr.mxu0 0.0
      %433 = vmatpush1.msra.mxu0 0.0
      %434 = vmatprep.subr.mxu0 0.0
      %435 = vmatpush1.msra.mxu0 0.0
      %436 = vmatprep.subr.mxu0 0.0
      %437 = vmatpush1.msra.mxu0 0.0
      %438 = vmatprep.subr.mxu0 0.0
      %439 = vmatpush1.msra.mxu0 0.0
      %440 = vmatprep.subr.mxu0 0.0
      %441 = vmatpush1.msra.mxu0 0.0
      %442 = vmatprep.subr.mxu0 0.0
      %443 = vmatpush1.msra.mxu0 0.0
      %444 = vmatprep.subr.mxu0 0.0
      %445 = vmatpush1.msra.mxu0 0.0
      %446 = vmatprep.subr.mxu0 0.0
      %447 = vmatpush1.msra.mxu0 0.0
      %448 = vmatprep.subr.mxu0 0.0
      %449 = vmatpush1.msra.mxu0 0.0
      %450 = vmatprep.subr.mxu0 0.0
      %451 = vmatpush1.msra.mxu0 0.0
      %452 = vmatprep.subr.mxu0 0.0
      %453 = vmatpush1.msra.mxu0 0.0
      %454 = vmatprep.subr.mxu0 0.0
      %455 = vmatpush1.msra.mxu0 0.0
      %456 = vmatprep.mubr.f32.mxu0 0.0
      %457 = vmatmul.mubr.f32.gmra.mrb[0].mxu0 %v381
      %v458 = vpop.f32.mrb[0].mxu0
      %v459 = vadd.f32 0.0, %v458
      %v460 = vpop.f32.mrb[0].mxu0
      %v461 = vadd.f32 0.0, %v460
      %462 = vmatprep.mubr.f32.mxu0 0.0
      %463 = vmatmul.mubr.f32.gmra.mrb[0].mxu0 %v384
      %v464 = vpop.f32.mrb[0].mxu0
      %v465 = vadd.f32 0.0, %v464
      %v466 = vpop.f32.mrb[0].mxu0
      %v467 = vadd.f32 0.0, %v466
      %468 = vdwg.mxu0
      %v469 = vadd.f32 %v361, %v459
      %v470 = vadd.f32 %v363, %v461
      %v471 = vadd.f32 %v367, %v465
      %v472 = vadd.f32 %v369, %v467
      %s473 = scalar_lea.vmem %s162, 24
      %v474 = vld [vmem:[%s473] sm:$0xff]
      %v475 = vld [vmem:[%s473 + $0x8] sm:$0xff]
      %s476 = scalar_lea.vmem %s1, 144
      %v477 = vld [vmem:[%s476] sm:$0xff]
      %v478 = vld [vmem:[%s476 + $0x8] sm:$0xff]
      %v479 = vld [vmem:[%s476 + $0x10] sm:$0xff]
      %v480 = vld [vmem:[%s476 + $0x18] sm:$0xff]
      %v481 = vld [vmem:[%s476 + $0x20] sm:$0x3]
      %v482 = vld [vmem:[%s476 + $0x28] sm:$0x3]
      %v484 = vsel %vm191, %v474, 0
      %v487 = vsel %vm191, %v475, 0
      %v490 = vsel %vm198, %v481, 0
      %v493 = vsel %vm198, %v482, 0
      %495 = vmatprep.subr.mxu0 %v478
      %496 = vmatpush1.msra.mxu0 %v477
      %497 = vmatprep.subr.mxu0 %v480
      %498 = vmatpush1.msra.mxu0 %v479
      %499 = vmatprep.subr.mxu0 %v493
      %500 = vmatpush1.msra.mxu0 %v490
      %501 = vmatprep.subr.mxu0 0.0
      %502 = vmatpush1.msra.mxu0 0.0
      %503 = vmatprep.subr.mxu0 0.0
      %504 = vmatpush1.msra.mxu0 0.0
      %505 = vmatprep.subr.mxu0 0.0
      %506 = vmatpush1.msra.mxu0 0.0
      %507 = vmatprep.subr.mxu0 0.0
      %508 = vmatpush1.msra.mxu0 0.0
      %509 = vmatprep.subr.mxu0 0.0
      %510 = vmatpush1.msra.mxu0 0.0
      %511 = vmatprep.subr.mxu0 0.0
      %512 = vmatpush1.msra.mxu0 0.0
      %513 = vmatprep.subr.mxu0 0.0
      %514 = vmatpush1.msra.mxu0 0.0
      %515 = vmatprep.subr.mxu0 0.0
      %516 = vmatpush1.msra.mxu0 0.0
      %517 = vmatprep.subr.mxu0 0.0
      %518 = vmatpush1.msra.mxu0 0.0
      %519 = vmatprep.subr.mxu0 0.0
      %520 = vmatpush1.msra.mxu0 0.0
      %521 = vmatprep.subr.mxu0 0.0
      %522 = vmatpush1.msra.mxu0 0.0
      %523 = vmatprep.subr.mxu0 0.0
      %524 = vmatpush1.msra.mxu0 0.0
      %525 = vmatprep.subr.mxu0 0.0
      %526 = vmatpush1.msra.mxu0 0.0
      %527 = vmatprep.subr.mxu0 0.0
      %528 = vmatpush1.msra.mxu0 0.0
      %529 = vmatprep.subr.mxu0 0.0
      %530 = vmatpush1.msra.mxu0 0.0
      %531 = vmatprep.subr.mxu0 0.0
      %532 = vmatpush1.msra.mxu0 0.0
      %533 = vmatprep.subr.mxu0 0.0
      %534 = vmatpush1.msra.mxu0 0.0
      %535 = vmatprep.subr.mxu0 0.0
      %536 = vmatpush1.msra.mxu0 0.0
      %537 = vmatprep.subr.mxu0 0.0
      %538 = vmatpush1.msra.mxu0 0.0
      %539 = vmatprep.subr.mxu0 0.0
      %540 = vmatpush1.msra.mxu0 0.0
      %541 = vmatprep.subr.mxu0 0.0
      %542 = vmatpush1.msra.mxu0 0.0
      %543 = vmatprep.subr.mxu0 0.0
      %544 = vmatpush1.msra.mxu0 0.0
      %545 = vmatprep.subr.mxu0 0.0
      %546 = vmatpush1.msra.mxu0 0.0
      %547 = vmatprep.subr.mxu0 0.0
      %548 = vmatpush1.msra.mxu0 0.0
      %549 = vmatprep.subr.mxu0 0.0
      %550 = vmatpush1.msra.mxu0 0.0
      %551 = vmatprep.subr.mxu0 0.0
      %552 = vmatpush1.msra.mxu0 0.0
      %553 = vmatprep.subr.mxu0 0.0
      %554 = vmatpush1.msra.mxu0 0.0
      %555 = vmatprep.subr.mxu0 0.0
      %556 = vmatpush1.msra.mxu0 0.0
      %557 = vmatprep.subr.mxu0 0.0
      %558 = vmatpush1.msra.mxu0 0.0
      %559 = vmatprep.mubr.f32.mxu0 0.0
      %560 = vmatmul.mubr.f32.gmra.mrb[0].mxu0 %v484
      %v561 = vpop.f32.mrb[0].mxu0
      %v562 = vadd.f32 0.0, %v561
      %v563 = vpop.f32.mrb[0].mxu0
      %v564 = vadd.f32 0.0, %v563
      %565 = vmatprep.mubr.f32.mxu0 0.0
      %566 = vmatmul.mubr.f32.gmra.mrb[0].mxu0 %v487
      %v567 = vpop.f32.mrb[0].mxu0
      %v568 = vadd.f32 0.0, %v567
      %v569 = vpop.f32.mrb[0].mxu0
      %v570 = vadd.f32 0.0, %v569
      %571 = vdwg.mxu0
      %v572 = vadd.f32 %v469, %v562
      %v573 = vadd.f32 %v470, %v564
      %v574 = vadd.f32 %v471, %v568
      %v575 = vadd.f32 %v472, %v570
      %v576 = vld [vmem:[%s473 + $0x1] sm:$0xff]
      %v577 = vld [vmem:[%s473 + $0x9] sm:$0xff]
      %s578 = scalar_lea.vmem %s1, 192
      %v579 = vld [vmem:[%s578] sm:$0xff]
      %v580 = vld [vmem:[%s578 + $0x8] sm:$0xff]
      %v581 = vld [vmem:[%s578 + $0x10] sm:$0xff]
      %v582 = vld [vmem:[%s578 + $0x18] sm:$0xff]
      %v583 = vld [vmem:[%s578 + $0x20] sm:$0x3]
      %v584 = vld [vmem:[%s578 + $0x28] sm:$0x3]
      %v586 = vsel %vm191, %v576, 0
      %v589 = vsel %vm191, %v577, 0
      %v592 = vsel %vm198, %v583, 0
      %v595 = vsel %vm198, %v584, 0
      %597 = vmatprep.subr.mxu0 %v580
      %598 = vmatpush1.msra.mxu0 %v579
      %599 = vmatprep.subr.mxu0 %v582
      %600 = vmatpush1.msra.mxu0 %v581
      %601 = vmatprep.subr.mxu0 %v595
      %602 = vmatpush1.msra.mxu0 %v592
      %603 = vmatprep.subr.mxu0 0.0
      %604 = vmatpush1.msra.mxu0 0.0
      %605 = vmatprep.subr.mxu0 0.0
      %606 = vmatpush1.msra.mxu0 0.0
      %607 = vmatprep.subr.mxu0 0.0
      %608 = vmatpush1.msra.mxu0 0.0
      %609 = vmatprep.subr.mxu0 0.0
      %610 = vmatpush1.msra.mxu0 0.0
      %611 = vmatprep.subr.mxu0 0.0
      %612 = vmatpush1.msra.mxu0 0.0
      %613 = vmatprep.subr.mxu0 0.0
      %614 = vmatpush1.msra.mxu0 0.0
      %615 = vmatprep.subr.mxu0 0.0
      %616 = vmatpush1.msra.mxu0 0.0
      %617 = vmatprep.subr.mxu0 0.0
      %618 = vmatpush1.msra.mxu0 0.0
      %619 = vmatprep.subr.mxu0 0.0
      %620 = vmatpush1.msra.mxu0 0.0
      %621 = vmatprep.subr.mxu0 0.0
      %622 = vmatpush1.msra.mxu0 0.0
      %623 = vmatprep.subr.mxu0 0.0
      %624 = vmatpush1.msra.mxu0 0.0
      %625 = vmatprep.subr.mxu0 0.0
      %626 = vmatpush1.msra.mxu0 0.0
      %627 = vmatprep.subr.mxu0 0.0
      %628 = vmatpush1.msra.mxu0 0.0
      %629 = vmatprep.subr.mxu0 0.0
      %630 = vmatpush1.msra.mxu0 0.0
      %631 = vmatprep.subr.mxu0 0.0
      %632 = vmatpush1.msra.mxu0 0.0
      %633 = vmatprep.subr.mxu0 0.0
      %634 = vmatpush1.msra.mxu0 0.0
      %635 = vmatprep.subr.mxu0 0.0
      %636 = vmatpush1.msra.mxu0 0.0
      %637 = vmatprep.subr.mxu0 0.0
      %638 = vmatpush1.msra.mxu0 0.0
      %639 = vmatprep.subr.mxu0 0.0
      %640 = vmatpush1.msra.mxu0 0.0
      %641 = vmatprep.subr.mxu0 0.0
      %642 = vmatpush1.msra.mxu0 0.0
      %643 = vmatprep.subr.mxu0 0.0
      %644 = vmatpush1.msra.mxu0 0.0
      %645 = vmatprep.subr.mxu0 0.0
      %646 = vmatpush1.msra.mxu0 0.0
      %647 = vmatprep.subr.mxu0 0.0
      %648 = vmatpush1.msra.mxu0 0.0
      %649 = vmatprep.subr.mxu0 0.0
      %650 = vmatpush1.msra.mxu0 0.0
      %651 = vmatprep.subr.mxu0 0.0
      %652 = vmatpush1.msra.mxu0 0.0
      %653 = vmatprep.subr.mxu0 0.0
      %654 = vmatpush1.msra.mxu0 0.0
      %655 = vmatprep.subr.mxu0 0.0
      %656 = vmatpush1.msra.mxu0 0.0
      %657 = vmatprep.subr.mxu0 0.0
      %658 = vmatpush1.msra.mxu0 0.0
      %659 = vmatprep.subr.mxu0 0.0
      %660 = vmatpush1.msra.mxu0 0.0
      %661 = vmatprep.mubr.f32.mxu0 0.0
      %662 = vmatmul.mubr.f32.gmra.mrb[0].mxu0 %v586
      %v663 = vpop.f32.mrb[0].mxu0
      %v664 = vadd.f32 0.0, %v663
      %v665 = vpop.f32.mrb[0].mxu0
      %v666 = vadd.f32 0.0, %v665
      %667 = vmatprep.mubr.f32.mxu0 0.0
      %668 = vmatmul.mubr.f32.gmra.mrb[0].mxu0 %v589
      %v669 = vpop.f32.mrb[0].mxu0
      %v670 = vadd.f32 0.0, %v669
      %v671 = vpop.f32.mrb[0].mxu0
      %v672 = vadd.f32 0.0, %v671
      %673 = vdwg.mxu0
      %v674 = vadd.f32 %v572, %v664
      %v675 = vadd.f32 %v573, %v666
      %v676 = vadd.f32 %v574, %v670
      %v677 = vadd.f32 %v575, %v672
      %v678 = vld [vmem:[%s473 + $0x2] sm:$0xff]
      %v679 = vld [vmem:[%s473 + $0xa] sm:$0xff]
      %s680 = scalar_lea.vmem %s1, 240
      %v681 = vld [vmem:[%s680] sm:$0xff]
      %v682 = vld [vmem:[%s680 + $0x8] sm:$0xff]
      %v683 = vld [vmem:[%s680 + $0x10] sm:$0xff]
      %v684 = vld [vmem:[%s680 + $0x18] sm:$0xff]
      %v685 = vld [vmem:[%s680 + $0x20] sm:$0x3]
      %v686 = vld [vmem:[%s680 + $0x28] sm:$0x3]
      %v688 = vsel %vm191, %v678, 0
      %v691 = vsel %vm191, %v679, 0
      %v694 = vsel %vm198, %v685, 0
      %v697 = vsel %vm198, %v686, 0
      %699 = vmatprep.subr.mxu0 %v682
      %700 = vmatpush1.msra.mxu0 %v681
      %701 = vmatprep.subr.mxu0 %v684
      %702 = vmatpush1.msra.mxu0 %v683
      %703 = vmatprep.subr.mxu0 %v697
      %704 = vmatpush1.msra.mxu0 %v694
      %705 = vmatprep.subr.mxu0 0.0
      %706 = vmatpush1.msra.mxu0 0.0
      %707 = vmatprep.subr.mxu0 0.0
      %708 = vmatpush1.msra.mxu0 0.0
      %709 = vmatprep.subr.mxu0 0.0
      %710 = vmatpush1.msra.mxu0 0.0
      %711 = vmatprep.subr.mxu0 0.0
      %712 = vmatpush1.msra.mxu0 0.0
      %713 = vmatprep.subr.mxu0 0.0
      %714 = vmatpush1.msra.mxu0 0.0
      %715 = vmatprep.subr.mxu0 0.0
      %716 = vmatpush1.msra.mxu0 0.0
      %717 = vmatprep.subr.mxu0 0.0
      %718 = vmatpush1.msra.mxu0 0.0
      %719 = vmatprep.subr.mxu0 0.0
      %720 = vmatpush1.msra.mxu0 0.0
      %721 = vmatprep.subr.mxu0 0.0
      %722 = vmatpush1.msra.mxu0 0.0
      %723 = vmatprep.subr.mxu0 0.0
      %724 = vmatpush1.msra.mxu0 0.0
      %725 = vmatprep.subr.mxu0 0.0
      %726 = vmatpush1.msra.mxu0 0.0
      %727 = vmatprep.subr.mxu0 0.0
      %728 = vmatpush1.msra.mxu0 0.0
      %729 = vmatprep.subr.mxu0 0.0
      %730 = vmatpush1.msra.mxu0 0.0
      %731 = vmatprep.subr.mxu0 0.0
      %732 = vmatpush1.msra.mxu0 0.0
      %733 = vmatprep.subr.mxu0 0.0
      %734 = vmatpush1.msra.mxu0 0.0
      %735 = vmatprep.subr.mxu0 0.0
      %736 = vmatpush1.msra.mxu0 0.0
      %737 = vmatprep.subr.mxu0 0.0
      %738 = vmatpush1.msra.mxu0 0.0
      %739 = vmatprep.subr.mxu0 0.0
      %740 = vmatpush1.msra.mxu0 0.0
      %741 = vmatprep.subr.mxu0 0.0
      %742 = vmatpush1.msra.mxu0 0.0
      %743 = vmatprep.subr.mxu0 0.0
      %744 = vmatpush1.msra.mxu0 0.0
      %745 = vmatprep.subr.mxu0 0.0
      %746 = vmatpush1.msra.mxu0 0.0
      %747 = vmatprep.subr.mxu0 0.0
      %748 = vmatpush1.msra.mxu0 0.0
      %749 = vmatprep.subr.mxu0 0.0
      %750 = vmatpush1.msra.mxu0 0.0
      %751 = vmatprep.subr.mxu0 0.0
      %752 = vmatpush1.msra.mxu0 0.0
      %753 = vmatprep.subr.mxu0 0.0
      %754 = vmatpush1.msra.mxu0 0.0
      %755 = vmatprep.subr.mxu0 0.0
      %756 = vmatpush1.msra.mxu0 0.0
      %757 = vmatprep.subr.mxu0 0.0
      %758 = vmatpush1.msra.mxu0 0.0
      %759 = vmatprep.subr.mxu0 0.0
      %760 = vmatpush1.msra.mxu0 0.0
      %761 = vmatprep.subr.mxu0 0.0
      %762 = vmatpush1.msra.mxu0 0.0
      %763 = vmatprep.mubr.f32.mxu0 0.0
      %764 = vmatmul.mubr.f32.gmra.mrb[0].mxu0 %v688
      %v765 = vpop.f32.mrb[0].mxu0
      %v766 = vadd.f32 0.0, %v765
      %v767 = vpop.f32.mrb[0].mxu0
      %v768 = vadd.f32 0.0, %v767
      %769 = vmatprep.mubr.f32.mxu0 0.0
      %770 = vmatmul.mubr.f32.gmra.mrb[0].mxu0 %v691
      %v771 = vpop.f32.mrb[0].mxu0
      %v772 = vadd.f32 0.0, %v771
      %v773 = vpop.f32.mrb[0].mxu0
      %v774 = vadd.f32 0.0, %v773
      %775 = vdwg.mxu0
      %v776 = vadd.f32 %v674, %v766
      %v777 = vadd.f32 %v675, %v768
      %v778 = vadd.f32 %v676, %v772
      %v779 = vadd.f32 %v677, %v774
      %s780 = scalar_lea.vmem %s162, 48
      %v781 = vld [vmem:[%s780] sm:$0xff]
      %v782 = vld [vmem:[%s780 + $0x8] sm:$0xff]
      %s783 = scalar_lea.vmem %s1, 288
      %v784 = vld [vmem:[%s783] sm:$0xff]
      %v785 = vld [vmem:[%s783 + $0x8] sm:$0xff]
      %v786 = vld [vmem:[%s783 + $0x10] sm:$0xff]
      %v787 = vld [vmem:[%s783 + $0x18] sm:$0xff]
      %v788 = vld [vmem:[%s783 + $0x20] sm:$0x3]
      %v789 = vld [vmem:[%s783 + $0x28] sm:$0x3]
      %v791 = vsel %vm191, %v781, 0
      %v794 = vsel %vm191, %v782, 0
      %v797 = vsel %vm198, %v788, 0
      %v800 = vsel %vm198, %v789, 0
      %802 = vmatprep.subr.mxu0 %v785
      %803 = vmatpush1.msra.mxu0 %v784
      %804 = vmatprep.subr.mxu0 %v787
      %805 = vmatpush1.msra.mxu0 %v786
      %806 = vmatprep.subr.mxu0 %v800
      %807 = vmatpush1.msra.mxu0 %v797
      %808 = vmatprep.subr.mxu0 0.0
      %809 = vmatpush1.msra.mxu0 0.0
      %810 = vmatprep.subr.mxu0 0.0
      %811 = vmatpush1.msra.mxu0 0.0
      %812 = vmatprep.subr.mxu0 0.0
      %813 = vmatpush1.msra.mxu0 0.0
      %814 = vmatprep.subr.mxu0 0.0
      %815 = vmatpush1.msra.mxu0 0.0
      %816 = vmatprep.subr.mxu0 0.0
      %817 = vmatpush1.msra.mxu0 0.0
      %818 = vmatprep.subr.mxu0 0.0
      %819 = vmatpush1.msra.mxu0 0.0
      %820 = vmatprep.subr.mxu0 0.0
      %821 = vmatpush1.msra.mxu0 0.0
      %822 = vmatprep.subr.mxu0 0.0
      %823 = vmatpush1.msra.mxu0 0.0
      %824 = vmatprep.subr.mxu0 0.0
      %825 = vmatpush1.msra.mxu0 0.0
      %826 = vmatprep.subr.mxu0 0.0
      %827 = vmatpush1.msra.mxu0 0.0
      %828 = vmatprep.subr.mxu0 0.0
      %829 = vmatpush1.msra.mxu0 0.0
      %830 = vmatprep.subr.mxu0 0.0
      %831 = vmatpush1.msra.mxu0 0.0
      %832 = vmatprep.subr.mxu0 0.0
      %833 = vmatpush1.msra.mxu0 0.0
      %834 = vmatprep.subr.mxu0 0.0
      %835 = vmatpush1.msra.mxu0 0.0
      %836 = vmatprep.subr.mxu0 0.0
      %837 = vmatpush1.msra.mxu0 0.0
      %838 = vmatprep.subr.mxu0 0.0
      %839 = vmatpush1.msra.mxu0 0.0
      %840 = vmatprep.subr.mxu0 0.0
      %841 = vmatpush1.msra.mxu0 0.0
      %842 = vmatprep.subr.mxu0 0.0
      %843 = vmatpush1.msra.mxu0 0.0
      %844 = vmatprep.subr.mxu0 0.0
      %845 = vmatpush1.msra.mxu0 0.0
      %846 = vmatprep.subr.mxu0 0.0
      %847 = vmatpush1.msra.mxu0 0.0
      %848 = vmatprep.subr.mxu0 0.0
      %849 = vmatpush1.msra.mxu0 0.0
      %850 = vmatprep.subr.mxu0 0.0
      %851 = vmatpush1.msra.mxu0 0.0
      %852 = vmatprep.subr.mxu0 0.0
      %853 = vmatpush1.msra.mxu0 0.0
      %854 = vmatprep.subr.mxu0 0.0
      %855 = vmatpush1.msra.mxu0 0.0
      %856 = vmatprep.subr.mxu0 0.0
      %857 = vmatpush1.msra.mxu0 0.0
      %858 = vmatprep.subr.mxu0 0.0
      %859 = vmatpush1.msra.mxu0 0.0
      %860 = vmatprep.subr.mxu0 0.0
      %861 = vmatpush1.msra.mxu0 0.0
      %862 = vmatprep.subr.mxu0 0.0
      %863 = vmatpush1.msra.mxu0 0.0
      %864 = vmatprep.subr.mxu0 0.0
      %865 = vmatpush1.msra.mxu0 0.0
      %866 = vmatprep.mubr.f32.mxu0 0.0
      %867 = vmatmul.mubr.f32.gmra.mrb[0].mxu0 %v791
      %v868 = vpop.f32.mrb[0].mxu0
      %v869 = vadd.f32 0.0, %v868
      %v870 = vpop.f32.mrb[0].mxu0
      %v871 = vadd.f32 0.0, %v870
      %872 = vmatprep.mubr.f32.mxu0 0.0
      %873 = vmatmul.mubr.f32.gmra.mrb[0].mxu0 %v794
      %v874 = vpop.f32.mrb[0].mxu0
      %v875 = vadd.f32 0.0, %v874
      %v876 = vpop.f32.mrb[0].mxu0
      %v877 = vadd.f32 0.0, %v876
      %878 = vdwg.mxu0
      %v879 = vadd.f32 %v776, %v869
      %v880 = vadd.f32 %v777, %v871
      %v881 = vadd.f32 %v778, %v875
      %v882 = vadd.f32 %v779, %v877
      %v883 = vld [vmem:[%s780 + $0x1] sm:$0xff]
      %v884 = vld [vmem:[%s780 + $0x9] sm:$0xff]
      %s885 = scalar_lea.vmem %s1, 336
      %v886 = vld [vmem:[%s885] sm:$0xff]
      %v887 = vld [vmem:[%s885 + $0x8] sm:$0xff]
      %v888 = vld [vmem:[%s885 + $0x10] sm:$0xff]
      %v889 = vld [vmem:[%s885 + $0x18] sm:$0xff]
      %v890 = vld [vmem:[%s885 + $0x20] sm:$0x3]
      %v891 = vld [vmem:[%s885 + $0x28] sm:$0x3]
      %v893 = vsel %vm191, %v883, 0
      %v896 = vsel %vm191, %v884, 0
      %v899 = vsel %vm198, %v890, 0
      %v902 = vsel %vm198, %v891, 0
      %904 = vmatprep.subr.mxu0 %v887
      %905 = vmatpush1.msra.mxu0 %v886
      %906 = vmatprep.subr.mxu0 %v889
      %907 = vmatpush1.msra.mxu0 %v888
      %908 = vmatprep.subr.mxu0 %v902
      %909 = vmatpush1.msra.mxu0 %v899
      %910 = vmatprep.subr.mxu0 0.0
      %911 = vmatpush1.msra.mxu0 0.0
      %912 = vmatprep.subr.mxu0 0.0
      %913 = vmatpush1.msra.mxu0 0.0
      %914 = vmatprep.subr.mxu0 0.0
      %915 = vmatpush1.msra.mxu0 0.0
      %916 = vmatprep.subr.mxu0 0.0
      %917 = vmatpush1.msra.mxu0 0.0
      %918 = vmatprep.subr.mxu0 0.0
      %919 = vmatpush1.msra.mxu0 0.0
      %920 = vmatprep.subr.mxu0 0.0
      %921 = vmatpush1.msra.mxu0 0.0
      %922 = vmatprep.subr.mxu0 0.0
      %923 = vmatpush1.msra.mxu0 0.0
      %924 = vmatprep.subr.mxu0 0.0
      %925 = vmatpush1.msra.mxu0 0.0
      %926 = vmatprep.subr.mxu0 0.0
      %927 = vmatpush1.msra.mxu0 0.0
      %928 = vmatprep.subr.mxu0 0.0
      %929 = vmatpush1.msra.mxu0 0.0
      %930 = vmatprep.subr.mxu0 0.0
      %931 = vmatpush1.msra.mxu0 0.0
      %932 = vmatprep.subr.mxu0 0.0
      %933 = vmatpush1.msra.mxu0 0.0
      %934 = vmatprep.subr.mxu0 0.0
      %935 = vmatpush1.msra.mxu0 0.0
      %936 = vmatprep.subr.mxu0 0.0
      %937 = vmatpush1.msra.mxu0 0.0
      %938 = vmatprep.subr.mxu0 0.0
      %939 = vmatpush1.msra.mxu0 0.0
      %940 = vmatprep.subr.mxu0 0.0
      %941 = vmatpush1.msra.mxu0 0.0
      %942 = vmatprep.subr.mxu0 0.0
      %943 = vmatpush1.msra.mxu0 0.0
      %944 = vmatprep.subr.mxu0 0.0
      %945 = vmatpush1.msra.mxu0 0.0
      %946 = vmatprep.subr.mxu0 0.0
      %947 = vmatpush1.msra.mxu0 0.0
      %948 = vmatprep.subr.mxu0 0.0
      %949 = vmatpush1.msra.mxu0 0.0
      %950 = vmatprep.subr.mxu0 0.0
      %951 = vmatpush1.msra.mxu0 0.0
      %952 = vmatprep.subr.mxu0 0.0
      %953 = vmatpush1.msra.mxu0 0.0
      %954 = vmatprep.subr.mxu0 0.0
      %955 = vmatpush1.msra.mxu0 0.0
      %956 = vmatprep.subr.mxu0 0.0
      %957 = vmatpush1.msra.mxu0 0.0
      %958 = vmatprep.subr.mxu0 0.0
      %959 = vmatpush1.msra.mxu0 0.0
      %960 = vmatprep.subr.mxu0 0.0
      %961 = vmatpush1.msra.mxu0 0.0
      %962 = vmatprep.subr.mxu0 0.0
      %963 = vmatpush1.msra.mxu0 0.0
      %964 = vmatprep.subr.mxu0 0.0
      %965 = vmatpush1.msra.mxu0 0.0
      %966 = vmatprep.subr.mxu0 0.0
      %967 = vmatpush1.msra.mxu0 0.0
      %968 = vmatprep.mubr.f32.mxu0 0.0
      %969 = vmatmul.mubr.f32.gmra.mrb[0].mxu0 %v893
      %v970 = vpop.f32.mrb[0].mxu0
      %v971 = vadd.f32 0.0, %v970
      %v972 = vpop.f32.mrb[0].mxu0
      %v973 = vadd.f32 0.0, %v972
      %974 = vmatprep.mubr.f32.mxu0 0.0
      %975 = vmatmul.mubr.f32.gmra.mrb[0].mxu0 %v896
      %v976 = vpop.f32.mrb[0].mxu0
      %v977 = vadd.f32 0.0, %v976
      %v978 = vpop.f32.mrb[0].mxu0
      %v979 = vadd.f32 0.0, %v978
      %980 = vdwg.mxu0
      %v981 = vadd.f32 %v879, %v971
      %v982 = vadd.f32 %v880, %v973
      %v983 = vadd.f32 %v881, %v977
      %v984 = vadd.f32 %v882, %v979
      %v985 = vld [vmem:[%s780 + $0x2] sm:$0xff]
      %v986 = vld [vmem:[%s780 + $0xa] sm:$0xff]
      %s987 = scalar_lea.vmem %s1, 384
      %v988 = vld [vmem:[%s987] sm:$0xff]
      %v989 = vld [vmem:[%s987 + $0x8] sm:$0xff]
      %v990 = vld [vmem:[%s987 + $0x10] sm:$0xff]
      %v991 = vld [vmem:[%s987 + $0x18] sm:$0xff]
      %v992 = vld [vmem:[%s987 + $0x20] sm:$0x3]
      %v993 = vld [vmem:[%s987 + $0x28] sm:$0x3]
      %v995 = vsel %vm191, %v985, 0
      %v998 = vsel %vm191, %v986, 0
      %v1001 = vsel %vm198, %v992, 0
      %v1004 = vsel %vm198, %v993, 0
      %1006 = vmatprep.subr.mxu0 %v989
      %1007 = vmatpush1.msra.mxu0 %v988
      %1008 = vmatprep.subr.mxu0 %v991
      %1009 = vmatpush1.msra.mxu0 %v990
      %1010 = vmatprep.subr.mxu0 %v1004
      %1011 = vmatpush1.msra.mxu0 %v1001
      %1012 = vmatprep.subr.mxu0 0.0
      %1013 = vmatpush1.msra.mxu0 0.0
      %1014 = vmatprep.subr.mxu0 0.0
      %1015 = vmatpush1.msra.mxu0 0.0
      %1016 = vmatprep.subr.mxu0 0.0
      %1017 = vmatpush1.msra.mxu0 0.0
      %1018 = vmatprep.subr.mxu0 0.0
      %1019 = vmatpush1.msra.mxu0 0.0
      %1020 = vmatprep.subr.mxu0 0.0
      %1021 = vmatpush1.msra.mxu0 0.0
      %1022 = vmatprep.subr.mxu0 0.0
      %1023 = vmatpush1.msra.mxu0 0.0
      %1024 = vmatprep.subr.mxu0 0.0
      %1025 = vmatpush1.msra.mxu0 0.0
      %1026 = vmatprep.subr.mxu0 0.0
      %1027 = vmatpush1.msra.mxu0 0.0
      %1028 = vmatprep.subr.mxu0 0.0
      %1029 = vmatpush1.msra.mxu0 0.0
      %1030 = vmatprep.subr.mxu0 0.0
      %1031 = vmatpush1.msra.mxu0 0.0
      %1032 = vmatprep.subr.mxu0 0.0
      %1033 = vmatpush1.msra.mxu0 0.0
      %1034 = vmatprep.subr.mxu0 0.0
      %1035 = vmatpush1.msra.mxu0 0.0
      %1036 = vmatprep.subr.mxu0 0.0
      %1037 = vmatpush1.msra.mxu0 0.0
      %1038 = vmatprep.subr.mxu0 0.0
      %1039 = vmatpush1.msra.mxu0 0.0
      %1040 = vmatprep.subr.mxu0 0.0
      %1041 = vmatpush1.msra.mxu0 0.0
      %1042 = vmatprep.subr.mxu0 0.0
      %1043 = vmatpush1.msra.mxu0 0.0
      %1044 = vmatprep.subr.mxu0 0.0
      %1045 = vmatpush1.msra.mxu0 0.0
      %1046 = vmatprep.subr.mxu0 0.0
      %1047 = vmatpush1.msra.mxu0 0.0
      %1048 = vmatprep.subr.mxu0 0.0
      %1049 = vmatpush1.msra.mxu0 0.0
      %1050 = vmatprep.subr.mxu0 0.0
      %1051 = vmatpush1.msra.mxu0 0.0
      %1052 = vmatprep.subr.mxu0 0.0
      %1053 = vmatpush1.msra.mxu0 0.0
      %1054 = vmatprep.subr.mxu0 0.0
      %1055 = vmatpush1.msra.mxu0 0.0
      %1056 = vmatprep.subr.mxu0 0.0
      %1057 = vmatpush1.msra.mxu0 0.0
      %1058 = vmatprep.subr.mxu0 0.0
      %1059 = vmatpush1.msra.mxu0 0.0
      %1060 = vmatprep.subr.mxu0 0.0
      %1061 = vmatpush1.msra.mxu0 0.0
      %1062 = vmatprep.subr.mxu0 0.0
      %1063 = vmatpush1.msra.mxu0 0.0
      %1064 = vmatprep.subr.mxu0 0.0
      %1065 = vmatpush1.msra.mxu0 0.0
      %1066 = vmatprep.subr.mxu0 0.0
      %1067 = vmatpush1.msra.mxu0 0.0
      %1068 = vmatprep.subr.mxu0 0.0
      %1069 = vmatpush1.msra.mxu0 0.0
      %1070 = vmatprep.mubr.f32.mxu0 0.0
      %1071 = vmatmul.mubr.f32.gmra.mrb[0].mxu0 %v995
      %v1072 = vpop.f32.mrb[0].mxu0
      %v1073 = vadd.f32 0.0, %v1072
      %v1074 = vpop.f32.mrb[0].mxu0
      %v1075 = vadd.f32 0.0, %v1074
      %1076 = vmatprep.mubr.f32.mxu0 0.0
      %1077 = vmatmul.mubr.f32.gmra.mrb[0].mxu0 %v998
      %v1078 = vpop.f32.mrb[0].mxu0
      %v1079 = vadd.f32 0.0, %v1078
      %v1080 = vpop.f32.mrb[0].mxu0
      %v1081 = vadd.f32 0.0, %v1080
      %1082 = vdwg.mxu0
      %v1083 = vadd.f32 %v981, %v1073
      %v1084 = vadd.f32 %v982, %v1075
      %v1085 = vadd.f32 %v983, %v1079
      %v1086 = vadd.f32 %v984, %v1081
      %s1087 = scalar_lea.vmem %s162, 72
      %v1088 = vld [vmem:[%s1087] sm:$0xff]
      %v1089 = vld [vmem:[%s1087 + $0x8] sm:$0xff]
      %s1090 = scalar_lea.vmem %s1, 432
      %v1091 = vld [vmem:[%s1090] sm:$0xff]
      %v1092 = vld [vmem:[%s1090 + $0x8] sm:$0xff]
      %v1093 = vld [vmem:[%s1090 + $0x10] sm:$0xff]
      %v1094 = vld [vmem:[%s1090 + $0x18] sm:$0xff]
      %v1095 = vld [vmem:[%s1090 + $0x20] sm:$0x3]
      %v1096 = vld [vmem:[%s1090 + $0x28] sm:$0x3]
      %v1098 = vsel %vm191, %v1088, 0
      %v1101 = vsel %vm191, %v1089, 0
      %v1104 = vsel %vm198, %v1095, 0
      %v1107 = vsel %vm198, %v1096, 0
      %1109 = vmatprep.subr.mxu0 %v1092
      %1110 = vmatpush1.msra.mxu0 %v1091
      %1111 = vmatprep.subr.mxu0 %v1094
      %1112 = vmatpush1.msra.mxu0 %v1093
      %1113 = vmatprep.subr.mxu0 %v1107
      %1114 = vmatpush1.msra.mxu0 %v1104
      %1115 = vmatprep.subr.mxu0 0.0
      %1116 = vmatpush1.msra.mxu0 0.0
      %1117 = vmatprep.subr.mxu0 0.0
      %1118 = vmatpush1.msra.mxu0 0.0
      %1119 = vmatprep.subr.mxu0 0.0
      %1120 = vmatpush1.msra.mxu0 0.0
      %1121 = vmatprep.subr.mxu0 0.0
      %1122 = vmatpush1.msra.mxu0 0.0
      %1123 = vmatprep.subr.mxu0 0.0
      %1124 = vmatpush1.msra.mxu0 0.0
      %1125 = vmatprep.subr.mxu0 0.0
      %1126 = vmatpush1.msra.mxu0 0.0
      %1127 = vmatprep.subr.mxu0 0.0
      %1128 = vmatpush1.msra.mxu0 0.0
      %1129 = vmatprep.subr.mxu0 0.0
      %1130 = vmatpush1.msra.mxu0 0.0
      %1131 = vmatprep.subr.mxu0 0.0
      %1132 = vmatpush1.msra.mxu0 0.0
      %1133 = vmatprep.subr.mxu0 0.0
      %1134 = vmatpush1.msra.mxu0 0.0
      %1135 = vmatprep.subr.mxu0 0.0
      %1136 = vmatpush1.msra.mxu0 0.0
      %1137 = vmatprep.subr.mxu0 0.0
      %1138 = vmatpush1.msra.mxu0 0.0
      %1139 = vmatprep.subr.mxu0 0.0
      %1140 = vmatpush1.msra.mxu0 0.0
      %1141 = vmatprep.subr.mxu0 0.0
      %1142 = vmatpush1.msra.mxu0 0.0
      %1143 = vmatprep.subr.mxu0 0.0
      %1144 = vmatpush1.msra.mxu0 0.0
      %1145 = vmatprep.subr.mxu0 0.0
      %1146 = vmatpush1.msra.mxu0 0.0
      %1147 = vmatprep.subr.mxu0 0.0
      %1148 = vmatpush1.msra.mxu0 0.0
      %1149 = vmatprep.subr.mxu0 0.0
      %1150 = vmatpush1.msra.mxu0 0.0
      %1151 = vmatprep.subr.mxu0 0.0
      %1152 = vmatpush1.msra.mxu0 0.0
      %1153 = vmatprep.subr.mxu0 0.0
      %1154 = vmatpush1.msra.mxu0 0.0
      %1155 = vmatprep.subr.mxu0 0.0
      %1156 = vmatpush1.msra.mxu0 0.0
      %1157 = vmatprep.subr.mxu0 0.0
      %1158 = vmatpush1.msra.mxu0 0.0
      %1159 = vmatprep.subr.mxu0 0.0
      %1160 = vmatpush1.msra.mxu0 0.0
      %1161 = vmatprep.subr.mxu0 0.0
      %1162 = vmatpush1.msra.mxu0 0.0
      %1163 = vmatprep.subr.mxu0 0.0
      %1164 = vmatpush1.msra.mxu0 0.0
      %1165 = vmatprep.subr.mxu0 0.0
      %1166 = vmatpush1.msra.mxu0 0.0
      %1167 = vmatprep.subr.mxu0 0.0
      %1168 = vmatpush1.msra.mxu0 0.0
      %1169 = vmatprep.subr.mxu0 0.0
      %1170 = vmatpush1.msra.mxu0 0.0
      %1171 = vmatprep.subr.mxu0 0.0
      %1172 = vmatpush1.msra.mxu0 0.0
      %1173 = vmatprep.mubr.f32.mxu0 0.0
      %1174 = vmatmul.mubr.f32.gmra.mrb[0].mxu0 %v1098
      %v1175 = vpop.f32.mrb[0].mxu0
      %v1176 = vadd.f32 0.0, %v1175
      %v1177 = vpop.f32.mrb[0].mxu0
      %v1178 = vadd.f32 0.0, %v1177
      %1179 = vmatprep.mubr.f32.mxu0 0.0
      %1180 = vmatmul.mubr.f32.gmra.mrb[0].mxu0 %v1101
      %v1181 = vpop.f32.mrb[0].mxu0
      %v1182 = vadd.f32 0.0, %v1181
      %v1183 = vpop.f32.mrb[0].mxu0
      %v1184 = vadd.f32 0.0, %v1183
      %1185 = vdwg.mxu0
      %v1186 = vadd.f32 %v1083, %v1176
      %v1187 = vadd.f32 %v1084, %v1178
      %v1188 = vadd.f32 %v1085, %v1182
      %v1189 = vadd.f32 %v1086, %v1184
      %v1190 = vld [vmem:[%s1087 + $0x1] sm:$0xff]
      %v1191 = vld [vmem:[%s1087 + $0x9] sm:$0xff]
      %s1192 = scalar_lea.vmem %s1, 480
      %v1193 = vld [vmem:[%s1192] sm:$0xff]
      %v1194 = vld [vmem:[%s1192 + $0x8] sm:$0xff]
      %v1195 = vld [vmem:[%s1192 + $0x10] sm:$0xff]
      %v1196 = vld [vmem:[%s1192 + $0x18] sm:$0xff]
      %v1197 = vld [vmem:[%s1192 + $0x20] sm:$0x3]
      %v1198 = vld [vmem:[%s1192 + $0x28] sm:$0x3]
      %v1200 = vsel %vm191, %v1190, 0
      %v1203 = vsel %vm191, %v1191, 0
      %v1206 = vsel %vm198, %v1197, 0
      %v1209 = vsel %vm198, %v1198, 0
      %1211 = vmatprep.subr.mxu0 %v1194
      %1212 = vmatpush1.msra.mxu0 %v1193
      %1213 = vmatprep.subr.mxu0 %v1196
      %1214 = vmatpush1.msra.mxu0 %v1195
      %1215 = vmatprep.subr.mxu0 %v1209
      %1216 = vmatpush1.msra.mxu0 %v1206
      %1217 = vmatprep.subr.mxu0 0.0
      %1218 = vmatpush1.msra.mxu0 0.0
      %1219 = vmatprep.subr.mxu0 0.0
      %1220 = vmatpush1.msra.mxu0 0.0
      %1221 = vmatprep.subr.mxu0 0.0
      %1222 = vmatpush1.msra.mxu0 0.0
      %1223 = vmatprep.subr.mxu0 0.0
      %1224 = vmatpush1.msra.mxu0 0.0
      %1225 = vmatprep.subr.mxu0 0.0
      %1226 = vmatpush1.msra.mxu0 0.0
      %1227 = vmatprep.subr.mxu0 0.0
      %1228 = vmatpush1.msra.mxu0 0.0
      %1229 = vmatprep.subr.mxu0 0.0
      %1230 = vmatpush1.msra.mxu0 0.0
      %1231 = vmatprep.subr.mxu0 0.0
      %1232 = vmatpush1.msra.mxu0 0.0
      %1233 = vmatprep.subr.mxu0 0.0
      %1234 = vmatpush1.msra.mxu0 0.0
      %1235 = vmatprep.subr.mxu0 0.0
      %1236 = vmatpush1.msra.mxu0 0.0
      %1237 = vmatprep.subr.mxu0 0.0
      %1238 = vmatpush1.msra.mxu0 0.0
      %1239 = vmatprep.subr.mxu0 0.0
      %1240 = vmatpush1.msra.mxu0 0.0
      %1241 = vmatprep.subr.mxu0 0.0
      %1242 = vmatpush1.msra.mxu0 0.0
      %1243 = vmatprep.subr.mxu0 0.0
      %1244 = vmatpush1.msra.mxu0 0.0
      %1245 = vmatprep.subr.mxu0 0.0
      %1246 = vmatpush1.msra.mxu0 0.0
      %1247 = vmatprep.subr.mxu0 0.0
      %1248 = vmatpush1.msra.mxu0 0.0
      %1249 = vmatprep.subr.mxu0 0.0
      %1250 = vmatpush1.msra.mxu0 0.0
      %1251 = vmatprep.subr.mxu0 0.0
      %1252 = vmatpush1.msra.mxu0 0.0
      %1253 = vmatprep.subr.mxu0 0.0
      %1254 = vmatpush1.msra.mxu0 0.0
      %1255 = vmatprep.subr.mxu0 0.0
      %1256 = vmatpush1.msra.mxu0 0.0
      %1257 = vmatprep.subr.mxu0 0.0
      %1258 = vmatpush1.msra.mxu0 0.0
      %1259 = vmatprep.subr.mxu0 0.0
      %1260 = vmatpush1.msra.mxu0 0.0
      %1261 = vmatprep.subr.mxu0 0.0
      %1262 = vmatpush1.msra.mxu0 0.0
      %1263 = vmatprep.subr.mxu0 0.0
      %1264 = vmatpush1.msra.mxu0 0.0
      %1265 = vmatprep.subr.mxu0 0.0
      %1266 = vmatpush1.msra.mxu0 0.0
      %1267 = vmatprep.subr.mxu0 0.0
      %1268 = vmatpush1.msra.mxu0 0.0
      %1269 = vmatprep.subr.mxu0 0.0
      %1270 = vmatpush1.msra.mxu0 0.0
      %1271 = vmatprep.subr.mxu0 0.0
      %1272 = vmatpush1.msra.mxu0 0.0
      %1273 = vmatprep.subr.mxu0 0.0
      %1274 = vmatpush1.msra.mxu0 0.0
      %1275 = vmatprep.mubr.f32.mxu0 0.0
      %1276 = vmatmul.mubr.f32.gmra.mrb[0].mxu0 %v1200
      %v1277 = vpop.f32.mrb[0].mxu0
      %v1278 = vadd.f32 0.0, %v1277
      %v1279 = vpop.f32.mrb[0].mxu0
      %v1280 = vadd.f32 0.0, %v1279
      %1281 = vmatprep.mubr.f32.mxu0 0.0
      %1282 = vmatmul.mubr.f32.gmra.mrb[0].mxu0 %v1203
      %v1283 = vpop.f32.mrb[0].mxu0
      %v1284 = vadd.f32 0.0, %v1283
      %v1285 = vpop.f32.mrb[0].mxu0
      %v1286 = vadd.f32 0.0, %v1285
      %1287 = vdwg.mxu0
      %v1288 = vadd.f32 %v1186, %v1278
      %v1289 = vadd.f32 %v1187, %v1280
      %v1290 = vadd.f32 %v1188, %v1284
      %v1291 = vadd.f32 %v1189, %v1286
      %v1292 = vld [vmem:[%s1087 + $0x2] sm:$0xff]
      %v1293 = vld [vmem:[%s1087 + $0xa] sm:$0xff]
      %s1294 = scalar_lea.vmem %s1, 528
      %v1295 = vld [vmem:[%s1294] sm:$0xff]
      %v1296 = vld [vmem:[%s1294 + $0x8] sm:$0xff]
      %v1297 = vld [vmem:[%s1294 + $0x10] sm:$0xff]
      %v1298 = vld [vmem:[%s1294 + $0x18] sm:$0xff]
      %v1299 = vld [vmem:[%s1294 + $0x20] sm:$0x3]
      %v1300 = vld [vmem:[%s1294 + $0x28] sm:$0x3]
      %v1302 = vsel %vm191, %v1292, 0
      %v1305 = vsel %vm191, %v1293, 0
      %v1308 = vsel %vm198, %v1299, 0
      %v1311 = vsel %vm198, %v1300, 0
      %1313 = vmatprep.subr.mxu0 %v1296
      %1314 = vmatpush1.msra.mxu0 %v1295
      %1315 = vmatprep.subr.mxu0 %v1298
      %1316 = vmatpush1.msra.mxu0 %v1297
      %1317 = vmatprep.subr.mxu0 %v1311
      %1318 = vmatpush1.msra.mxu0 %v1308
      %1319 = vmatprep.subr.mxu0 0.0
      %1320 = vmatpush1.msra.mxu0 0.0
      %1321 = vmatprep.subr.mxu0 0.0
      %1322 = vmatpush1.msra.mxu0 0.0
      %1323 = vmatprep.subr.mxu0 0.0
      %1324 = vmatpush1.msra.mxu0 0.0
      %1325 = vmatprep.subr.mxu0 0.0
      %1326 = vmatpush1.msra.mxu0 0.0
      %1327 = vmatprep.subr.mxu0 0.0
      %1328 = vmatpush1.msra.mxu0 0.0
      %1329 = vmatprep.subr.mxu0 0.0
      %1330 = vmatpush1.msra.mxu0 0.0
      %1331 = vmatprep.subr.mxu0 0.0
      %1332 = vmatpush1.msra.mxu0 0.0
      %1333 = vmatprep.subr.mxu0 0.0
      %1334 = vmatpush1.msra.mxu0 0.0
      %1335 = vmatprep.subr.mxu0 0.0
      %1336 = vmatpush1.msra.mxu0 0.0
      %1337 = vmatprep.subr.mxu0 0.0
      %1338 = vmatpush1.msra.mxu0 0.0
      %1339 = vmatprep.subr.mxu0 0.0
      %1340 = vmatpush1.msra.mxu0 0.0
      %1341 = vmatprep.subr.mxu0 0.0
      %1342 = vmatpush1.msra.mxu0 0.0
      %1343 = vmatprep.subr.mxu0 0.0
      %1344 = vmatpush1.msra.mxu0 0.0
      %1345 = vmatprep.subr.mxu0 0.0
      %1346 = vmatpush1.msra.mxu0 0.0
      %1347 = vmatprep.subr.mxu0 0.0
      %1348 = vmatpush1.msra.mxu0 0.0
      %1349 = vmatprep.subr.mxu0 0.0
      %1350 = vmatpush1.msra.mxu0 0.0
      %1351 = vmatprep.subr.mxu0 0.0
      %1352 = vmatpush1.msra.mxu0 0.0
      %1353 = vmatprep.subr.mxu0 0.0
      %1354 = vmatpush1.msra.mxu0 0.0
      %1355 = vmatprep.subr.mxu0 0.0
      %1356 = vmatpush1.msra.mxu0 0.0
      %1357 = vmatprep.subr.mxu0 0.0
      %1358 = vmatpush1.msra.mxu0 0.0
      %1359 = vmatprep.subr.mxu0 0.0
      %1360 = vmatpush1.msra.mxu0 0.0
      %1361 = vmatprep.subr.mxu0 0.0
      %1362 = vmatpush1.msra.mxu0 0.0
      %1363 = vmatprep.subr.mxu0 0.0
      %1364 = vmatpush1.msra.mxu0 0.0
      %1365 = vmatprep.subr.mxu0 0.0
      %1366 = vmatpush1.msra.mxu0 0.0
      %1367 = vmatprep.subr.mxu0 0.0
      %1368 = vmatpush1.msra.mxu0 0.0
      %1369 = vmatprep.subr.mxu0 0.0
      %1370 = vmatpush1.msra.mxu0 0.0
      %1371 = vmatprep.subr.mxu0 0.0
      %1372 = vmatpush1.msra.mxu0 0.0
      %1373 = vmatprep.subr.mxu0 0.0
      %1374 = vmatpush1.msra.mxu0 0.0
      %1375 = vmatprep.subr.mxu0 0.0
      %1376 = vmatpush1.msra.mxu0 0.0
      %1377 = vmatprep.mubr.f32.mxu0 0.0
      %1378 = vmatmul.mubr.f32.gmra.mrb[0].mxu0 %v1302
      %v1379 = vpop.f32.mrb[0].mxu0
      %v1380 = vadd.f32 0.0, %v1379
      %v1381 = vpop.f32.mrb[0].mxu0
      %v1382 = vadd.f32 0.0, %v1381
      %1383 = vmatprep.mubr.f32.mxu0 0.0
      %1384 = vmatmul.mubr.f32.gmra.mrb[0].mxu0 %v1305
      %v1385 = vpop.f32.mrb[0].mxu0
      %v1386 = vadd.f32 0.0, %v1385
      %v1387 = vpop.f32.mrb[0].mxu0
      %v1388 = vadd.f32 0.0, %v1387
      %1389 = vdwg.mxu0
      %v1390 = vadd.f32 %v1288, %v1380
      %v1391 = vadd.f32 %v1289, %v1382
      %v1392 = vadd.f32 %v1290, %v1386
      %v1393 = vadd.f32 %v1291, %v1388
      %vm1394 = vcmask 523264
      %1395 = vst.msk [vmem:[%s172] sm:$0xff] %vm1394, %v1390
      %1396 = vst.msk [vmem:[%s172 + $0x8] sm:$0xff] %vm1394, %v1392
      %s1397 = scalar_lea.vmem %s172, 16
      %1398 = vst.msk [vmem:[%s1397] sm:$0xff] %vm1394, %v1391
      %1399 = vst.msk [vmem:[%s1397 + $0x8] sm:$0xff] %vm1394, %v1393
      %s1400 = smul.u32 2, %s18
      %p1401 = scmp.lt.s32.totalorder %s17, 1
      %s1402 = scalar_select %p1401, %s17, 1
      %p1403 = scmp.lt.s32.totalorder %s1400, 1
      %s1404 = scalar_select %p1403, %s1400, 1
      %s1405 = smul.addr %s1402, 4
      %s1406 = sadd.s32 %s1404, %s1405
      %s1407 = smul.addr %s1406, 8
      %s1408 = scalar_lea.vmem %s2, %s1407
      // Predicated region
      $region29: #{upsample_forward.1} parent=27 // pred_check
        %p1409 = pneg %p94
      $region30: #{upsample_forward.1} parent=27 // pred_check_branch
        %1411 = sbr.rel (%p1409) target = $region32
      $region31: #{upsample_forward.1} parent=27 // pred_region
        %s1412 = smul.u32 2, %s18
      $region32: #{upsample_forward.1} parent=27 // pred_fallthru
        _
    $region28: #{upsample_forward.1} parent=5 // pred_fallthru
      _
    %p1413 = scmp.le.s32.totalorder 2, %s8
    // Predicated region
    $region33: #{upsample_forward.1} parent=5 // pred_check
      %p1414 = pneg %p1413
    $region34: #{upsample_forward.1} parent=5 // pred_check_branch
      %1416 = sbr.rel (%p1414) target = $region36
    $region35: #{upsample_forward.1} parent=5 // pred_region
      %s1417 = ssub.s32 %s8, 2
      // Predicated region
      $region37: #{upsample_forward.1} parent=35 // pred_check
        %p1418 = pneg %p100
      $region38: #{upsample_forward.1} parent=35 // pred_check_branch
        %1420 = sbr.rel (%p1418) target = $region40
      $region39: #{upsample_forward.1} parent=35 // pred_region
        %s1421 = smul.u32 2, %s20
        %p1422 = scmp.lt.s32.totalorder %s19, 1
        %s1423 = scalar_select %p1422, %s19, 1
        %p1424 = scmp.lt.s32.totalorder %s1421, 1
        %s1425 = scalar_select %p1424, %s1421, 1
        %s1426 = smul.addr %s1423, 4
        %s1427 = sadd.s32 %s1425, %s1426
        %s1428 = smul.addr %s1427, 8
        %s1429 = scalar_lea.vmem %s2, %s1428
      $region40: #{upsample_forward.1} parent=35 // pred_fallthru
        _
    $region36: #{upsample_forward.1} parent=5 // pred_fallthru
      _
  $region6: #{upsample_forward.1} parent=0 // loop_footer
    %s12 = sadd.s32 1, %s8
  $region7: #{upsample_forward.1} parent=0 // loop_footer_branch
    %7 = sbr.rel target = $region3
  $region8: #{upsample_forward.1} parent=0 // loop_exit
    _

</llo_original>
